<compile_context>
chip_gen: v7x
topology: tpu7x:2x2x1
jax: 0.10.0
libtpu: 0.0.40
codegen_flags: <defaults>
</compile_context>

<pallas_src>
import jax
import jax.numpy as jnp
from jax.experimental import pallas as pl
from jax.experimental.pallas import tpu as pltpu


def _bilinear_matrix(in_size: int, out_size: int) -> jnp.ndarray:
    """(out_size, in_size) matrix reproducing torch.nn.Upsample(mode='bilinear',
    align_corners=False) along one axis (half-pixel centers, edge clamp)."""
    scale = in_size / out_size
    out_idx = jnp.arange(out_size, dtype=jnp.float32)
    src = jnp.maximum((out_idx + 0.5) * scale - 0.5, 0.0)
    i0 = jnp.clip(jnp.floor(src).astype(jnp.int32), 0, in_size - 1)
    i1 = jnp.clip(i0 + 1, 0, in_size - 1)
    frac = src - i0.astype(jnp.float32)
    m0 = jax.nn.one_hot(i0, in_size, dtype=jnp.float32) * (1.0 - frac)[:, None]
    m1 = jax.nn.one_hot(i1, in_size, dtype=jnp.float32) * frac[:, None]
    return m0 + m1


def _upsample_conv_kernel(x_ref, w_ref, uh_ref, uwt_ref, o_ref):
    # x_ref  : (1, Cin, H, W)    VMEM, one batch element, NCHW (W on lanes)
    # w_ref  : (Cout, Cin)       SMEM, 1x1 conv weights (scalar reads)
    # uh_ref : (2H, H)           VMEM, H-axis bilinear interpolation matrix
    # uwt_ref: (W, 2W)           VMEM, W-axis interpolation matrix, transposed
    # o_ref  : (1, Cout, 2H, 2W) VMEM, NCHW output (2W on lanes -> dense vst)
    cout, cin = w_ref.shape
    uh = uh_ref[...]
    uwt = uwt_ref[...]

    # Stream one output channel at a time: small live intermediates, the conv
    # (VPU scalar * tile FMAs) and the upsample matmuls (MXU) overlap with the
    # pipelined output writeback.
    for co in range(cout):
        # 1x1 conv first (channel mix on the LOW-res grid): Cin fused
        # multiply-adds of (H, W) tiles with SMEM scalar weights.
        z = w_ref[co, 0] * x_ref[0, 0]
        for ci in range(1, cin):
            z = z + w_ref[co, ci] * x_ref[0, ci]

        # Separable bilinear 2x upsample as two flat 2D MXU matmuls
        # (phase interleave is encoded in the matrix rows/cols).
        yh = jnp.dot(uh, z, preferred_element_type=jnp.float32)      # (2H, W)
        out = jnp.dot(yh, uwt, preferred_element_type=jnp.float32)   # (2H, 2W)

        o_ref[0, co] = out.astype(o_ref.dtype)


def upsample_forward(x_nchw: jnp.ndarray, conv_w: jnp.ndarray) -> jnp.ndarray:
    """x_nchw: (N, Cin, H, W); conv_w: (Cout, Cin, 1, 1) — PyTorch conventions.

    Returns (N, Cout, 2H, 2W), same semantics as
    Upsample(scale_factor=2, bilinear, align_corners=False) -> Conv2d(1x1, no bias).
    """
    N, Cin, H, W = x_nchw.shape
    Cout = conv_w.shape[0]
    Hout, Wout = 2 * H, 2 * W

    w2d = conv_w[:, :, 0, 0]                      # (Cout, Cin)
    uh = _bilinear_matrix(H, Hout)                # (Hout, H)
    uwt = _bilinear_matrix(W, Wout).T             # (W, Wout)

    out = pl.pallas_call(
        _upsample_conv_kernel,
        out_shape=jax.ShapeDtypeStruct((N, Cout, Hout, Wout), x_nchw.dtype),
        grid_spec=pltpu.PrefetchScalarGridSpec(
            num_scalar_prefetch=0,
            grid=(N,),
            in_specs=[
                # Per-batch NCHW block: W on lanes, H on sublanes (lane-dense).
                pl.BlockSpec((1, Cin, H, W), lambda n: (n, 0, 0, 0)),
                # Tiny conv weight table -> SMEM scalars.
                pl.BlockSpec(memory_space=pltpu.MemorySpace.SMEM),
                # Interpolation matrices: constant index map -> stay resident.
                pl.BlockSpec((Hout, H), lambda n: (0, 0)),
                pl.BlockSpec((W, Wout), lambda n: (0, 0)),
            ],
            # Lane-dense NCHW output block (last dim = Wout, full width).
            out_specs=pl.BlockSpec((1, Cout, Hout, Wout), lambda n: (n, 0, 0, 0)),
        ),
        compiler_params=pltpu.CompilerParams(
            dimension_semantics=("parallel",),
        ),
    )(x_nchw, w2d, uh, uwt)
    return out


def _reference_forward(x_nchw, conv_w):
    """Pure-JAX reference (upsample THEN conv, original module order)."""
    N, Cin, H, W = x_nchw.shape
    uh = _bilinear_matrix(H, 2 * H)
    uw = _bilinear_matrix(W, 2 * W)
    up = jnp.einsum("ph,nchw->ncpw", uh, x_nchw)
    up = jnp.einsum("qw,ncpw->ncpq", uw, up)
    w2d = conv_w[:, :, 0, 0]                      # (Cout, Cin)
    return jnp.einsum("oc,ncpq->nopq", w2d, up)


if __name__ == "__main__":
    in_channels = 4
    s_factor = 2
    N, H, W = 2, 16, 16
    Cin = in_channels + s_factor
    Cout = in_channels

    key = jax.random.PRNGKey(0)
    kx, kw = jax.random.split(key)
    x = jax.random.normal(kx, (N, Cin, H, W), dtype=jnp.float32)
    # PyTorch Conv2d default init: U(-1/sqrt(fan_in), 1/sqrt(fan_in)), fan_in = Cin*1*1
    bound = 1.0 / (Cin ** 0.5)
    conv_w = jax.random.uniform(
        kw, (Cout, Cin, 1, 1), dtype=jnp.float32, minval=-bound, maxval=bound
    )

    out = upsample_forward(x, conv_w)
    out = jax.block_until_ready(out)

    ref = _reference_forward(x, conv_w)
    assert out.shape == (N, Cout, 2 * H, 2 * W), out.shape
    assert jnp.allclose(out, ref, atol=1e-4, rtol=1e-4), "mismatch vs reference"

    print("KERNEL_OK")
</pallas_src>

<mosaic_0001>
module attributes {stable_mosaic.version = 11 : i64} {
  func.func @_upsample_conv_kernel(%arg0: i32, %arg1: memref<1x6x16x16xf32, #tpu.memory_space<vmem>>, %arg2: memref<4x6xf32, #tpu.memory_space<smem>>, %arg3: memref<32x16xf32, #tpu.memory_space<vmem>>, %arg4: memref<16x32xf32, #tpu.memory_space<vmem>>, %arg5: memref<1x4x32x32xf32, #tpu.memory_space<vmem>>) attributes {dimension_semantics = [#tpu.dimension_semantics<parallel>], iteration_bounds = array<i64: 2>, scalar_prefetch = 0 : i64, scratch_operands = 0 : i64, tpu.core_type = #tpu.core_type<tc>, window_params = [{transform_indices = @transform_0, window_bounds = array<i64: 1, 6, 16, 16>}, {transform_indices = @transform_1, window_bounds = array<i64: 4, 6>}, {pipeline_mode = #tpu.pipeline_mode<synchronous>, transform_indices = @transform_2, window_bounds = array<i64: 32, 16>}, {pipeline_mode = #tpu.pipeline_mode<synchronous>, transform_indices = @transform_3, window_bounds = array<i64: 16, 32>}, {transform_indices = @transform_4, window_bounds = array<i64: 1, 4, 32, 32>}]} {
    %c0 = arith.constant 0 : index
    %c0_0 = arith.constant 0 : index
    %0 = vector.load %arg3[%c0, %c0_0] : memref<32x16xf32, #tpu.memory_space<vmem>>, vector<32x16xf32>
    %c0_1 = arith.constant 0 : index
    %c0_2 = arith.constant 0 : index
    %1 = vector.load %arg4[%c0_1, %c0_2] : memref<16x32xf32, #tpu.memory_space<vmem>>, vector<16x32xf32>
    %c0_3 = arith.constant 0 : index
    %c0_4 = arith.constant 0 : index
    %2 = memref.load %arg2[%c0_3, %c0_4] : memref<4x6xf32, #tpu.memory_space<smem>>
    %c0_5 = arith.constant 0 : index
    %c0_6 = arith.constant 0 : index
    %c0_7 = arith.constant 0 : index
    %c0_8 = arith.constant 0 : index
    %3 = vector.load %arg1[%c0_5, %c0_6, %c0_7, %c0_8] : memref<1x6x16x16xf32, #tpu.memory_space<vmem>>, vector<1x1x16x16xf32>
    %4 = vector.shape_cast %3 : vector<1x1x16x16xf32> to vector<16x16xf32>
    %5 = vector.broadcast %2 : f32 to vector<16x16xf32>
    %6 = arith.mulf %5, %4 : vector<16x16xf32>
    %c0_9 = arith.constant 0 : index
    %c1 = arith.constant 1 : index
    %7 = memref.load %arg2[%c0_9, %c1] : memref<4x6xf32, #tpu.memory_space<smem>>
    %c0_10 = arith.constant 0 : index
    %c1_11 = arith.constant 1 : index
    %c0_12 = arith.constant 0 : index
    %c0_13 = arith.constant 0 : index
    %8 = vector.load %arg1[%c0_10, %c1_11, %c0_12, %c0_13] : memref<1x6x16x16xf32, #tpu.memory_space<vmem>>, vector<1x1x16x16xf32>
    %9 = vector.shape_cast %8 : vector<1x1x16x16xf32> to vector<16x16xf32>
    %10 = vector.broadcast %7 : f32 to vector<16x16xf32>
    %11 = arith.mulf %10, %9 : vector<16x16xf32>
    %12 = arith.addf %6, %11 : vector<16x16xf32>
    %c0_14 = arith.constant 0 : index
    %c2 = arith.constant 2 : index
    %13 = memref.load %arg2[%c0_14, %c2] : memref<4x6xf32, #tpu.memory_space<smem>>
    %c0_15 = arith.constant 0 : index
    %c2_16 = arith.constant 2 : index
    %c0_17 = arith.constant 0 : index
    %c0_18 = arith.constant 0 : index
    %14 = vector.load %arg1[%c0_15, %c2_16, %c0_17, %c0_18] : memref<1x6x16x16xf32, #tpu.memory_space<vmem>>, vector<1x1x16x16xf32>
    %15 = vector.shape_cast %14 : vector<1x1x16x16xf32> to vector<16x16xf32>
    %16 = vector.broadcast %13 : f32 to vector<16x16xf32>
    %17 = arith.mulf %16, %15 : vector<16x16xf32>
    %18 = arith.addf %12, %17 : vector<16x16xf32>
    %c0_19 = arith.constant 0 : index
    %c3 = arith.constant 3 : index
    %19 = memref.load %arg2[%c0_19, %c3] : memref<4x6xf32, #tpu.memory_space<smem>>
    %c0_20 = arith.constant 0 : index
    %c3_21 = arith.constant 3 : index
    %c0_22 = arith.constant 0 : index
    %c0_23 = arith.constant 0 : index
    %20 = vector.load %arg1[%c0_20, %c3_21, %c0_22, %c0_23] : memref<1x6x16x16xf32, #tpu.memory_space<vmem>>, vector<1x1x16x16xf32>
    %21 = vector.shape_cast %20 : vector<1x1x16x16xf32> to vector<16x16xf32>
    %22 = vector.broadcast %19 : f32 to vector<16x16xf32>
    %23 = arith.mulf %22, %21 : vector<16x16xf32>
    %24 = arith.addf %18, %23 : vector<16x16xf32>
    %c0_24 = arith.constant 0 : index
    %c4 = arith.constant 4 : index
    %25 = memref.load %arg2[%c0_24, %c4] : memref<4x6xf32, #tpu.memory_space<smem>>
    %c0_25 = arith.constant 0 : index
    %c4_26 = arith.constant 4 : index
    %c0_27 = arith.constant 0 : index
    %c0_28 = arith.constant 0 : index
    %26 = vector.load %arg1[%c0_25, %c4_26, %c0_27, %c0_28] : memref<1x6x16x16xf32, #tpu.memory_space<vmem>>, vector<1x1x16x16xf32>
    %27 = vector.shape_cast %26 : vector<1x1x16x16xf32> to vector<16x16xf32>
    %28 = vector.broadcast %25 : f32 to vector<16x16xf32>
    %29 = arith.mulf %28, %27 : vector<16x16xf32>
    %30 = arith.addf %24, %29 : vector<16x16xf32>
    %c0_29 = arith.constant 0 : index
    %c5 = arith.constant 5 : index
    %31 = memref.load %arg2[%c0_29, %c5] : memref<4x6xf32, #tpu.memory_space<smem>>
    %c0_30 = arith.constant 0 : index
    %c5_31 = arith.constant 5 : index
    %c0_32 = arith.constant 0 : index
    %c0_33 = arith.constant 0 : index
    %32 = vector.load %arg1[%c0_30, %c5_31, %c0_32, %c0_33] : memref<1x6x16x16xf32, #tpu.memory_space<vmem>>, vector<1x1x16x16xf32>
    %33 = vector.shape_cast %32 : vector<1x1x16x16xf32> to vector<16x16xf32>
    %34 = vector.broadcast %31 : f32 to vector<16x16xf32>
    %35 = arith.mulf %34, %33 : vector<16x16xf32>
    %36 = arith.addf %30, %35 : vector<16x16xf32>
    %cst = arith.constant dense<0.000000e+00> : vector<32x16xf32>
    %37 = tpu.matmul %0, %36, %cst {dimension_numbers = #tpu.dot_dimension_numbers<[1], [0], [0], [1], [0, 0, 1, 1], [], []>} : vector<32x16xf32>, vector<16x16xf32>, vector<32x16xf32> -> vector<32x16xf32>
    %cst_34 = arith.constant dense<0.000000e+00> : vector<32x32xf32>
    %38 = tpu.matmul %37, %1, %cst_34 {dimension_numbers = #tpu.dot_dimension_numbers<[1], [0], [0], [1], [0, 0, 1, 1], [], []>} : vector<32x16xf32>, vector<16x32xf32>, vector<32x32xf32> -> vector<32x32xf32>
    %c0_35 = arith.constant 0 : index
    %c0_36 = arith.constant 0 : index
    %c0_37 = arith.constant 0 : index
    %c0_38 = arith.constant 0 : index
    %39 = vector.load %arg5[%c0_35, %c0_36, %c0_37, %c0_38] : memref<1x4x32x32xf32, #tpu.memory_space<vmem>>, vector<1x1x32x32xf32>
    %40 = vector.shape_cast %39 : vector<1x1x32x32xf32> to vector<32x32xf32>
    %41 = vector.shape_cast %38 : vector<32x32xf32> to vector<1x1x32x32xf32>
    tpu.vector_store %arg5[%c0_35, %c0_36, %c0_37, %c0_38], %41 {strides = array<i32>} : memref<1x4x32x32xf32, #tpu.memory_space<vmem>>, vector<1x1x32x32xf32>,
    %c1_39 = arith.constant 1 : index
    %c0_40 = arith.constant 0 : index
    %42 = memref.load %arg2[%c1_39, %c0_40] : memref<4x6xf32, #tpu.memory_space<smem>>
    %c0_41 = arith.constant 0 : index
    %c0_42 = arith.constant 0 : index
    %c0_43 = arith.constant 0 : index
    %c0_44 = arith.constant 0 : index
    %43 = vector.load %arg1[%c0_41, %c0_42, %c0_43, %c0_44] : memref<1x6x16x16xf32, #tpu.memory_space<vmem>>, vector<1x1x16x16xf32>
    %44 = vector.shape_cast %43 : vector<1x1x16x16xf32> to vector<16x16xf32>
    %45 = vector.broadcast %42 : f32 to vector<16x16xf32>
    %46 = arith.mulf %45, %44 : vector<16x16xf32>
    %c1_45 = arith.constant 1 : index
    %c1_46 = arith.constant 1 : index
    %47 = memref.load %arg2[%c1_45, %c1_46] : memref<4x6xf32, #tpu.memory_space<smem>>
    %c0_47 = arith.constant 0 : index
    %c1_48 = arith.constant 1 : index
    %c0_49 = arith.constant 0 : index
    %c0_50 = arith.constant 0 : index
    %48 = vector.load %arg1[%c0_47, %c1_48, %c0_49, %c0_50] : memref<1x6x16x16xf32, #tpu.memory_space<vmem>>, vector<1x1x16x16xf32>
    %49 = vector.shape_cast %48 : vector<1x1x16x16xf32> to vector<16x16xf32>
    %50 = vector.broadcast %47 : f32 to vector<16x16xf32>
    %51 = arith.mulf %50, %49 : vector<16x16xf32>
    %52 = arith.addf %46, %51 : vector<16x16xf32>
    %c1_51 = arith.constant 1 : index
    %c2_52 = arith.constant 2 : index
    %53 = memref.load %arg2[%c1_51, %c2_52] : memref<4x6xf32, #tpu.memory_space<smem>>
    %c0_53 = arith.constant 0 : index
    %c2_54 = arith.constant 2 : index
    %c0_55 = arith.constant 0 : index
    %c0_56 = arith.constant 0 : index
    %54 = vector.load %arg1[%c0_53, %c2_54, %c0_55, %c0_56] : memref<1x6x16x16xf32, #tpu.memory_space<vmem>>, vector<1x1x16x16xf32>
    %55 = vector.shape_cast %54 : vector<1x1x16x16xf32> to vector<16x16xf32>
    %56 = vector.broadcast %53 : f32 to vector<16x16xf32>
    %57 = arith.mulf %56, %55 : vector<16x16xf32>
    %58 = arith.addf %52, %57 : vector<16x16xf32>
    %c1_57 = arith.constant 1 : index
    %c3_58 = arith.constant 3 : index
    %59 = memref.load %arg2[%c1_57, %c3_58] : memref<4x6xf32, #tpu.memory_space<smem>>
    %c0_59 = arith.constant 0 : index
    %c3_60 = arith.constant 3 : index
    %c0_61 = arith.constant 0 : index
    %c0_62 = arith.constant 0 : index
    %60 = vector.load %arg1[%c0_59, %c3_60, %c0_61, %c0_62] : memref<1x6x16x16xf32, #tpu.memory_space<vmem>>, vector<1x1x16x16xf32>
    %61 = vector.shape_cast %60 : vector<1x1x16x16xf32> to vector<16x16xf32>
    %62 = vector.broadcast %59 : f32 to vector<16x16xf32>
    %63 = arith.mulf %62, %61 : vector<16x16xf32>
    %64 = arith.addf %58, %63 : vector<16x16xf32>
    %c1_63 = arith.constant 1 : index
    %c4_64 = arith.constant 4 : index
    %65 = memref.load %arg2[%c1_63, %c4_64] : memref<4x6xf32, #tpu.memory_space<smem>>
    %c0_65 = arith.constant 0 : index
    %c4_66 = arith.constant 4 : index
    %c0_67 = arith.constant 0 : index
    %c0_68 = arith.constant 0 : index
    %66 = vector.load %arg1[%c0_65, %c4_66, %c0_67, %c0_68] : memref<1x6x16x16xf32, #tpu.memory_space<vmem>>, vector<1x1x16x16xf32>
    %67 = vector.shape_cast %66 : vector<1x1x16x16xf32> to vector<16x16xf32>
    %68 = vector.broadcast %65 : f32 to vector<16x16xf32>
    %69 = arith.mulf %68, %67 : vector<16x16xf32>
    %70 = arith.addf %64, %69 : vector<16x16xf32>
    %c1_69 = arith.constant 1 : index
    %c5_70 = arith.constant 5 : index
    %71 = memref.load %arg2[%c1_69, %c5_70] : memref<4x6xf32, #tpu.memory_space<smem>>
    %c0_71 = arith.constant 0 : index
    %c5_72 = arith.constant 5 : index
    %c0_73 = arith.constant 0 : index
    %c0_74 = arith.constant 0 : index
    %72 = vector.load %arg1[%c0_71, %c5_72, %c0_73, %c0_74] : memref<1x6x16x16xf32, #tpu.memory_space<vmem>>, vector<1x1x16x16xf32>
    %73 = vector.shape_cast %72 : vector<1x1x16x16xf32> to vector<16x16xf32>
    %74 = vector.broadcast %71 : f32 to vector<16x16xf32>
    %75 = arith.mulf %74, %73 : vector<16x16xf32>
    %76 = arith.addf %70, %75 : vector<16x16xf32>
    %cst_75 = arith.constant dense<0.000000e+00> : vector<32x16xf32>
    %77 = tpu.matmul %0, %76, %cst_75 {dimension_numbers = #tpu.dot_dimension_numbers<[1], [0], [0], [1], [0, 0, 1, 1], [], []>} : vector<32x16xf32>, vector<16x16xf32>, vector<32x16xf32> -> vector<32x16xf32>
    %cst_76 = arith.constant dense<0.000000e+00> : vector<32x32xf32>
    %78 = tpu.matmul %77, %1, %cst_76 {dimension_numbers = #tpu.dot_dimension_numbers<[1], [0], [0], [1], [0, 0, 1, 1], [], []>} : vector<32x16xf32>, vector<16x32xf32>, vector<32x32xf32> -> vector<32x32xf32>
    %c0_77 = arith.constant 0 : index
    %c1_78 = arith.constant 1 : index
    %c0_79 = arith.constant 0 : index
    %c0_80 = arith.constant 0 : index
    %79 = vector.load %arg5[%c0_77, %c1_78, %c0_79, %c0_80] : memref<1x4x32x32xf32, #tpu.memory_space<vmem>>, vector<1x1x32x32xf32>
    %80 = vector.shape_cast %79 : vector<1x1x32x32xf32> to vector<32x32xf32>
    %81 = vector.shape_cast %78 : vector<32x32xf32> to vector<1x1x32x32xf32>
    tpu.vector_store %arg5[%c0_77, %c1_78, %c0_79, %c0_80], %81 {strides = array<i32>} : memref<1x4x32x32xf32, #tpu.memory_space<vmem>>, vector<1x1x32x32xf32>,
    %c2_81 = arith.constant 2 : index
    %c0_82 = arith.constant 0 : index
    %82 = memref.load %arg2[%c2_81, %c0_82] : memref<4x6xf32, #tpu.memory_space<smem>>
    %c0_83 = arith.constant 0 : index
    %c0_84 = arith.constant 0 : index
    %c0_85 = arith.constant 0 : index
    %c0_86 = arith.constant 0 : index
    %83 = vector.load %arg1[%c0_83, %c0_84, %c0_85, %c0_86] : memref<1x6x16x16xf32, #tpu.memory_space<vmem>>, vector<1x1x16x16xf32>
    %84 = vector.shape_cast %83 : vector<1x1x16x16xf32> to vector<16x16xf32>
    %85 = vector.broadcast %82 : f32 to vector<16x16xf32>
    %86 = arith.mulf %85, %84 : vector<16x16xf32>
    %c2_87 = arith.constant 2 : index
    %c1_88 = arith.constant 1 : index
    %87 = memref.load %arg2[%c2_87, %c1_88] : memref<4x6xf32, #tpu.memory_space<smem>>
    %c0_89 = arith.constant 0 : index
    %c1_90 = arith.constant 1 : index
    %c0_91 = arith.constant 0 : index
    %c0_92 = arith.constant 0 : index
    %88 = vector.load %arg1[%c0_89, %c1_90, %c0_91, %c0_92] : memref<1x6x16x16xf32, #tpu.memory_space<vmem>>, vector<1x1x16x16xf32>
    %89 = vector.shape_cast %88 : vector<1x1x16x16xf32> to vector<16x16xf32>
    %90 = vector.broadcast %87 : f32 to vector<16x16xf32>
    %91 = arith.mulf %90, %89 : vector<16x16xf32>
    %92 = arith.addf %86, %91 : vector<16x16xf32>
    %c2_93 = arith.constant 2 : index
    %c2_94 = arith.constant 2 : index
    %93 = memref.load %arg2[%c2_93, %c2_94] : memref<4x6xf32, #tpu.memory_space<smem>>
    %c0_95 = arith.constant 0 : index
    %c2_96 = arith.constant 2 : index
    %c0_97 = arith.constant 0 : index
    %c0_98 = arith.constant 0 : index
    %94 = vector.load %arg1[%c0_95, %c2_96, %c0_97, %c0_98] : memref<1x6x16x16xf32, #tpu.memory_space<vmem>>, vector<1x1x16x16xf32>
    %95 = vector.shape_cast %94 : vector<1x1x16x16xf32> to vector<16x16xf32>
    %96 = vector.broadcast %93 : f32 to vector<16x16xf32>
    %97 = arith.mulf %96, %95 : vector<16x16xf32>
    %98 = arith.addf %92, %97 : vector<16x16xf32>
    %c2_99 = arith.constant 2 : index
    %c3_100 = arith.constant 3 : index
    %99 = memref.load %arg2[%c2_99, %c3_100] : memref<4x6xf32, #tpu.memory_space<smem>>
    %c0_101 = arith.constant 0 : index
    %c3_102 = arith.constant 3 : index
    %c0_103 = arith.constant 0 : index
    %c0_104 = arith.constant 0 : index
    %100 = vector.load %arg1[%c0_101, %c3_102, %c0_103, %c0_104] : memref<1x6x16x16xf32, #tpu.memory_space<vmem>>, vector<1x1x16x16xf32>
    %101 = vector.shape_cast %100 : vector<1x1x16x16xf32> to vector<16x16xf32>
    %102 = vector.broadcast %99 : f32 to vector<16x16xf32>
    %103 = arith.mulf %102, %101 : vector<16x16xf32>
    %104 = arith.addf %98, %103 : vector<16x16xf32>
    %c2_105 = arith.constant 2 : index
    %c4_106 = arith.constant 4 : index
    %105 = memref.load %arg2[%c2_105, %c4_106] : memref<4x6xf32, #tpu.memory_space<smem>>
    %c0_107 = arith.constant 0 : index
    %c4_108 = arith.constant 4 : index
    %c0_109 = arith.constant 0 : index
    %c0_110 = arith.constant 0 : index
    %106 = vector.load %arg1[%c0_107, %c4_108, %c0_109, %c0_110] : memref<1x6x16x16xf32, #tpu.memory_space<vmem>>, vector<1x1x16x16xf32>
    %107 = vector.shape_cast %106 : vector<1x1x16x16xf32> to vector<16x16xf32>
    %108 = vector.broadcast %105 : f32 to vector<16x16xf32>
    %109 = arith.mulf %108, %107 : vector<16x16xf32>
    %110 = arith.addf %104, %109 : vector<16x16xf32>
    %c2_111 = arith.constant 2 : index
    %c5_112 = arith.constant 5 : index
    %111 = memref.load %arg2[%c2_111, %c5_112] : memref<4x6xf32, #tpu.memory_space<smem>>
    %c0_113 = arith.constant 0 : index
    %c5_114 = arith.constant 5 : index
    %c0_115 = arith.constant 0 : index
    %c0_116 = arith.constant 0 : index
    %112 = vector.load %arg1[%c0_113, %c5_114, %c0_115, %c0_116] : memref<1x6x16x16xf32, #tpu.memory_space<vmem>>, vector<1x1x16x16xf32>
    %113 = vector.shape_cast %112 : vector<1x1x16x16xf32> to vector<16x16xf32>
    %114 = vector.broadcast %111 : f32 to vector<16x16xf32>
    %115 = arith.mulf %114, %113 : vector<16x16xf32>
    %116 = arith.addf %110, %115 : vector<16x16xf32>
    %cst_117 = arith.constant dense<0.000000e+00> : vector<32x16xf32>
    %117 = tpu.matmul %0, %116, %cst_117 {dimension_numbers = #tpu.dot_dimension_numbers<[1], [0], [0], [1], [0, 0, 1, 1], [], []>} : vector<32x16xf32>, vector<16x16xf32>, vector<32x16xf32> -> vector<32x16xf32>
    %cst_118 = arith.constant dense<0.000000e+00> : vector<32x32xf32>
    %118 = tpu.matmul %117, %1, %cst_118 {dimension_numbers = #tpu.dot_dimension_numbers<[1], [0], [0], [1], [0, 0, 1, 1], [], []>} : vector<32x16xf32>, vector<16x32xf32>, vector<32x32xf32> -> vector<32x32xf32>
    %c0_119 = arith.constant 0 : index
    %c2_120 = arith.constant 2 : index
    %c0_121 = arith.constant 0 : index
    %c0_122 = arith.constant 0 : index
    %119 = vector.load %arg5[%c0_119, %c2_120, %c0_121, %c0_122] : memref<1x4x32x32xf32, #tpu.memory_space<vmem>>, vector<1x1x32x32xf32>
    %120 = vector.shape_cast %119 : vector<1x1x32x32xf32> to vector<32x32xf32>
    %121 = vector.shape_cast %118 : vector<32x32xf32> to vector<1x1x32x32xf32>
    tpu.vector_store %arg5[%c0_119, %c2_120, %c0_121, %c0_122], %121 {strides = array<i32>} : memref<1x4x32x32xf32, #tpu.memory_space<vmem>>, vector<1x1x32x32xf32>,
    %c3_123 = arith.constant 3 : index
    %c0_124 = arith.constant 0 : index
    %122 = memref.load %arg2[%c3_123, %c0_124] : memref<4x6xf32, #tpu.memory_space<smem>>
    %c0_125 = arith.constant 0 : index
    %c0_126 = arith.constant 0 : index
    %c0_127 = arith.constant 0 : index
    %c0_128 = arith.constant 0 : index
    %123 = vector.load %arg1[%c0_125, %c0_126, %c0_127, %c0_128] : memref<1x6x16x16xf32, #tpu.memory_space<vmem>>, vector<1x1x16x16xf32>
    %124 = vector.shape_cast %123 : vector<1x1x16x16xf32> to vector<16x16xf32>
    %125 = vector.broadcast %122 : f32 to vector<16x16xf32>
    %126 = arith.mulf %125, %124 : vector<16x16xf32>
    %c3_129 = arith.constant 3 : index
    %c1_130 = arith.constant 1 : index
    %127 = memref.load %arg2[%c3_129, %c1_130] : memref<4x6xf32, #tpu.memory_space<smem>>
    %c0_131 = arith.constant 0 : index
    %c1_132 = arith.constant 1 : index
    %c0_133 = arith.constant 0 : index
    %c0_134 = arith.constant 0 : index
    %128 = vector.load %arg1[%c0_131, %c1_132, %c0_133, %c0_134] : memref<1x6x16x16xf32, #tpu.memory_space<vmem>>, vector<1x1x16x16xf32>
    %129 = vector.shape_cast %128 : vector<1x1x16x16xf32> to vector<16x16xf32>
    %130 = vector.broadcast %127 : f32 to vector<16x16xf32>
    %131 = arith.mulf %130, %129 : vector<16x16xf32>
    %132 = arith.addf %126, %131 : vector<16x16xf32>
    %c3_135 = arith.constant 3 : index
    %c2_136 = arith.constant 2 : index
    %133 = memref.load %arg2[%c3_135, %c2_136] : memref<4x6xf32, #tpu.memory_space<smem>>
    %c0_137 = arith.constant 0 : index
    %c2_138 = arith.constant 2 : index
    %c0_139 = arith.constant 0 : index
    %c0_140 = arith.constant 0 : index
    %134 = vector.load %arg1[%c0_137, %c2_138, %c0_139, %c0_140] : memref<1x6x16x16xf32, #tpu.memory_space<vmem>>, vector<1x1x16x16xf32>
    %135 = vector.shape_cast %134 : vector<1x1x16x16xf32> to vector<16x16xf32>
    %136 = vector.broadcast %133 : f32 to vector<16x16xf32>
    %137 = arith.mulf %136, %135 : vector<16x16xf32>
    %138 = arith.addf %132, %137 : vector<16x16xf32>
    %c3_141 = arith.constant 3 : index
    %c3_142 = arith.constant 3 : index
    %139 = memref.load %arg2[%c3_141, %c3_142] : memref<4x6xf32, #tpu.memory_space<smem>>
    %c0_143 = arith.constant 0 : index
    %c3_144 = arith.constant 3 : index
    %c0_145 = arith.constant 0 : index
    %c0_146 = arith.constant 0 : index
    %140 = vector.load %arg1[%c0_143, %c3_144, %c0_145, %c0_146] : memref<1x6x16x16xf32, #tpu.memory_space<vmem>>, vector<1x1x16x16xf32>
    %141 = vector.shape_cast %140 : vector<1x1x16x16xf32> to vector<16x16xf32>
    %142 = vector.broadcast %139 : f32 to vector<16x16xf32>
    %143 = arith.mulf %142, %141 : vector<16x16xf32>
    %144 = arith.addf %138, %143 : vector<16x16xf32>
    %c3_147 = arith.constant 3 : index
    %c4_148 = arith.constant 4 : index
    %145 = memref.load %arg2[%c3_147, %c4_148] : memref<4x6xf32, #tpu.memory_space<smem>>
    %c0_149 = arith.constant 0 : index
    %c4_150 = arith.constant 4 : index
    %c0_151 = arith.constant 0 : index
    %c0_152 = arith.constant 0 : index
    %146 = vector.load %arg1[%c0_149, %c4_150, %c0_151, %c0_152] : memref<1x6x16x16xf32, #tpu.memory_space<vmem>>, vector<1x1x16x16xf32>
    %147 = vector.shape_cast %146 : vector<1x1x16x16xf32> to vector<16x16xf32>
    %148 = vector.broadcast %145 : f32 to vector<16x16xf32>
    %149 = arith.mulf %148, %147 : vector<16x16xf32>
    %150 = arith.addf %144, %149 : vector<16x16xf32>
    %c3_153 = arith.constant 3 : index
    %c5_154 = arith.constant 5 : index
    %151 = memref.load %arg2[%c3_153, %c5_154] : memref<4x6xf32, #tpu.memory_space<smem>>
    %c0_155 = arith.constant 0 : index
    %c5_156 = arith.constant 5 : index
    %c0_157 = arith.constant 0 : index
    %c0_158 = arith.constant 0 : index
    %152 = vector.load %arg1[%c0_155, %c5_156, %c0_157, %c0_158] : memref<1x6x16x16xf32, #tpu.memory_space<vmem>>, vector<1x1x16x16xf32>
    %153 = vector.shape_cast %152 : vector<1x1x16x16xf32> to vector<16x16xf32>
    %154 = vector.broadcast %151 : f32 to vector<16x16xf32>
    %155 = arith.mulf %154, %153 : vector<16x16xf32>
    %156 = arith.addf %150, %155 : vector<16x16xf32>
    %cst_159 = arith.constant dense<0.000000e+00> : vector<32x16xf32>
    %157 = tpu.matmul %0, %156, %cst_159 {dimension_numbers = #tpu.dot_dimension_numbers<[1], [0], [0], [1], [0, 0, 1, 1], [], []>} : vector<32x16xf32>, vector<16x16xf32>, vector<32x16xf32> -> vector<32x16xf32>
    %cst_160 = arith.constant dense<0.000000e+00> : vector<32x32xf32>
    %158 = tpu.matmul %157, %1, %cst_160 {dimension_numbers = #tpu.dot_dimension_numbers<[1], [0], [0], [1], [0, 0, 1, 1], [], []>} : vector<32x16xf32>, vector<16x32xf32>, vector<32x32xf32> -> vector<32x32xf32>
    %c0_161 = arith.constant 0 : index
    %c3_162 = arith.constant 3 : index
    %c0_163 = arith.constant 0 : index
    %c0_164 = arith.constant 0 : index
    %159 = vector.load %arg5[%c0_161, %c3_162, %c0_163, %c0_164] : memref<1x4x32x32xf32, #tpu.memory_space<vmem>>, vector<1x1x32x32xf32>
    %160 = vector.shape_cast %159 : vector<1x1x32x32xf32> to vector<32x32xf32>
    %161 = vector.shape_cast %158 : vector<32x32xf32> to vector<1x1x32x32xf32>
    tpu.vector_store %arg5[%c0_161, %c3_162, %c0_163, %c0_164], %161 {strides = array<i32>} : memref<1x4x32x32xf32, #tpu.memory_space<vmem>>, vector<1x1x32x32xf32>,
    return
  }
  func.func @transform_0(%arg0: i32) -> (i32, i32, i32, i32) {
    %c0_i32 = arith.constant 0 : i32
    %c0_i32_0 = arith.constant 0 : i32
    %c0_i32_1 = arith.constant 0 : i32
    %c0_i32_2 = arith.constant 0 : i32
    return %arg0, %c0_i32, %c0_i32_0, %c0_i32_1 : i32, i32, i32, i32
  }
  func.func @transform_1(%arg0: i32) -> (i32, i32) {
    %c0_i32 = arith.constant 0 : i32
    %c0_i32_0 = arith.constant 0 : i32
    %c0_i32_1 = arith.constant 0 : i32
    return %c0_i32, %c0_i32_0 : i32, i32
  }
  func.func @transform_2(%arg0: i32) -> (i32, i32) {
    %c0_i32 = arith.constant 0 : i32
    %c0_i32_0 = arith.constant 0 : i32
    %c0_i32_1 = arith.constant 0 : i32
    return %c0_i32, %c0_i32_0 : i32, i32
  }
  func.func @transform_3(%arg0: i32) -> (i32, i32) {
    %c0_i32 = arith.constant 0 : i32
    %c0_i32_0 = arith.constant 0 : i32
    %c0_i32_1 = arith.constant 0 : i32
    return %c0_i32, %c0_i32_0 : i32, i32
  }
  func.func @transform_4(%arg0: i32) -> (i32, i32, i32, i32) {
    %c0_i32 = arith.constant 0 : i32
    %c0_i32_0 = arith.constant 0 : i32
    %c0_i32_1 = arith.constant 0 : i32
    %c0_i32_2 = arith.constant 0 : i32
    return %arg0, %c0_i32, %c0_i32_0, %c0_i32_1 : i32, i32, i32, i32
  }
}

</mosaic_0001>

<llo_original>
// kernel: tpu_custom_call.1
$region0: #{tpu_custom_call.1}
  #allocation0 [shape = 'u32[]', space=smem, size = 0x4, offset = 0x4, fixed_abs, tag = 'smem constant byte address 0x4 - core index']
  #allocation1 [shape = 'u32[144,128]{1,0:T(1,128)}', space=vmem, size = 0x12000, scoped, tag = 'internal scratch']
  %s0 = inlined_call_operand.hbm [shape: f32[2,6,16,16], index: 0, kind: input, shape index: {}]
  %s1 = inlined_call_operand.vmem [shape: f32[4,6], index: 1, kind: input, shape index: {}]
  %s2 = inlined_call_operand.vmem [shape: f32[32,16], index: 2, kind: input, shape index: {}]
  %s3 = inlined_call_operand.vmem [shape: f32[16,32], index: 3, kind: input, shape index: {}]
  %s4 = inlined_call_operand.hbm [shape: f32[2,4,32,32], index: 4, kind: output, shape index: {}]
  %s5 = sld [smem:[#allocation0]]
  $region57: #{tpu_custom_call.1} parent=0
    _
  %s7 = ssub.s32 1, %s5
  %s8 = scalar_select 0, %s7, %s5
  $region1: #{tpu_custom_call.1} parent=0
    #allocation2 [shape = 'u8[98304]{0}', space=vmem, size = 0x18000, scoped, tag = 'input window, operand 0']
    #allocation3 [shape = 's32[2]{0}', space=sflag, size = 0x8, scoped, tag = 'scoped memory for tpu_custom_call.1']
    #allocation4 [shape = 's32[2]{0}', space=sflag, size = 0x8, scoped, tag = 'scoped memory for tpu_custom_call.1']
    #allocation5 [shape = 's32[2]{0}', space=sflag, size = 0x8, scoped, tag = 'scoped memory for tpu_custom_call.1']
    #allocation6 [shape = 'u8[2048]{0}', space=smem, size = 0x800, scoped, tag = 'input window, operand 1, single buffered']
    #allocation7 [shape = 'u8[131072]{0}', space=vmem, size = 0x20000, scoped, tag = 'output window, operand 0']
    %9 = vsyncpa [#allocation3], 0
    %s10 = scalar_lea.sflag [#allocation3], 1
    %11 = vsyncpa %s10, 0
    %12 = vsyncpa [#allocation5], 0
    %13 = vsyncpa [#allocation4], 0
    %s14 = scalar_lea.sflag [#allocation4], 1
    %15 = vsyncpa %s14, 0
    loop: start=0, step=1, limit=4
    $region2: #{tpu_custom_call.1} parent=1 // loop_pre_header
      _
    $region3: #{tpu_custom_call.1} parent=1 // loop_header
      %s17 = sphi 0, %s21
      %p18 = scmp.ge.s32.totalorder %s17, 4
      %s27 = sphi 0, %s29
      %s30 = sphi 0, %s27
      %s31 = sphi 0, %s30
      %s47 = sphi 0, %s31
      %s51 = sphi 0, %s51
      %s53 = sphi 0, %s51
      %s54 = sphi 0, %s53
      %s68 = sphi 0, %s54
      %s72 = sphi 0, %s72
      %s74 = sphi 0, %s72
      %s75 = sphi 0, %s74
      %s89 = sphi 0, %s75
      %s93 = sphi 0, %s93
      %s95 = sphi 0, %s93
      %s96 = sphi 0, %s95
      %s110 = sphi 0, %s96
      %s116 = sphi 0, %s118
      %s119 = sphi 0, %s116
      %s120 = sphi 0, %s119
      %s136 = sphi 0, %s120
    $region4: #{tpu_custom_call.1} parent=1 // loop_header_branch
      %20 = sbr.rel (%p18) target = $region8
    $region5: #{tpu_custom_call.1} parent=1 // loop_body
      %s22 = ssub.s32 %s17, 1
      %s23 = ssub.s32 %s17, 2
      %s24 = sadd.s32 %s17, 1
      %s25 = ssub.s32 %s17, %s24
      %p26 = scmp.eq.s32.totalorder %s25, 0
      %s28 = sadd.s32 %s27, 1
      %s29 = scalar_select %p26, %s27, %s28
      %p32 = pneg %p26
      %p33 = scmp.eq.s32.totalorder %s17, 1
      %p34 = por %p32, %p33
      %p35 = scmp.ne.s32.totalorder %s27, %s30
      %p36 = scmp.eq.s32.totalorder %s17, 0
      %p37 = por %p35, %p36
      %p38 = scmp.ne.s32.totalorder %s27, %s30
      %p39 = scmp.eq.s32.totalorder %s22, 1
      %p40 = por %p38, %p39
      %p41 = scmp.ne.s32.totalorder %s30, %s31
      %p42 = scmp.eq.s32.totalorder %s22, 0
      %p43 = por %p41, %p42
      %p44 = scmp.ne.s32.totalorder %s30, %s31
      %p45 = scmp.eq.s32.totalorder %s23, 1
      %p46 = por %p44, %p45
      %p48 = scmp.ne.s32.totalorder %s31, %s47
      %p49 = scmp.eq.s32.totalorder %s23, 0
      %p50 = por %p48, %p49
      %s52 = sadd.s32 %s51, 1
      %p55 = scmp.eq.s32.totalorder %s17, 1
      %p56 = scmp.ne.s32.totalorder %s51, %s53
      %p57 = scmp.eq.s32.totalorder %s17, 0
      %p58 = por %p56, %p57
      %p59 = scmp.ne.s32.totalorder %s51, %s53
      %p60 = scmp.eq.s32.totalorder %s22, 1
      %p61 = por %p59, %p60
      %p62 = scmp.ne.s32.totalorder %s53, %s54
      %p63 = scmp.eq.s32.totalorder %s22, 0
      %p64 = por %p62, %p63
      %p65 = scmp.ne.s32.totalorder %s53, %s54
      %p66 = scmp.eq.s32.totalorder %s23, 1
      %p67 = por %p65, %p66
      %p69 = scmp.ne.s32.totalorder %s54, %s68
      %p70 = scmp.eq.s32.totalorder %s23, 0
      %p71 = por %p69, %p70
      %s73 = sadd.s32 %s72, 1
      %p76 = scmp.eq.s32.totalorder %s17, 1
      %p77 = scmp.ne.s32.totalorder %s72, %s74
      %p78 = scmp.eq.s32.totalorder %s17, 0
      %p79 = por %p77, %p78
      %p80 = scmp.ne.s32.totalorder %s72, %s74
      %p81 = scmp.eq.s32.totalorder %s22, 1
      %p82 = por %p80, %p81
      %p83 = scmp.ne.s32.totalorder %s74, %s75
      %p84 = scmp.eq.s32.totalorder %s22, 0
      %p85 = por %p83, %p84
      %p86 = scmp.ne.s32.totalorder %s74, %s75
      %p87 = scmp.eq.s32.totalorder %s23, 1
      %p88 = por %p86, %p87
      %p90 = scmp.ne.s32.totalorder %s75, %s89
      %p91 = scmp.eq.s32.totalorder %s23, 0
      %p92 = por %p90, %p91
      %s94 = sadd.s32 %s93, 1
      %p97 = scmp.eq.s32.totalorder %s17, 1
      %p98 = scmp.ne.s32.totalorder %s93, %s95
      %p99 = scmp.eq.s32.totalorder %s17, 0
      %p100 = por %p98, %p99
      %p101 = scmp.ne.s32.totalorder %s93, %s95
      %p102 = scmp.eq.s32.totalorder %s22, 1
      %p103 = por %p101, %p102
      %p104 = scmp.ne.s32.totalorder %s95, %s96
      %p105 = scmp.eq.s32.totalorder %s22, 0
      %p106 = por %p104, %p105
      %p107 = scmp.ne.s32.totalorder %s95, %s96
      %p108 = scmp.eq.s32.totalorder %s23, 1
      %p109 = por %p107, %p108
      %p111 = scmp.ne.s32.totalorder %s96, %s110
      %p112 = scmp.eq.s32.totalorder %s23, 0
      %p113 = por %p111, %p112
      %s114 = ssub.s32 %s17, %s24
      %p115 = scmp.eq.s32.totalorder %s114, 0
      %s117 = sadd.s32 %s116, 1
      %s118 = scalar_select %p115, %s116, %s117
      %p121 = pneg %p115
      %p122 = scmp.eq.s32.totalorder %s17, 1
      %p123 = por %p121, %p122
      %p124 = scmp.ne.s32.totalorder %s116, %s119
      %p125 = scmp.eq.s32.totalorder %s17, 0
      %p126 = por %p124, %p125
      %p127 = scmp.ne.s32.totalorder %s116, %s119
      %p128 = scmp.eq.s32.totalorder %s22, 1
      %p129 = por %p127, %p128
      %p130 = scmp.ne.s32.totalorder %s119, %s120
      %p131 = scmp.eq.s32.totalorder %s22, 0
      %p132 = por %p130, %p131
      %p133 = scmp.ne.s32.totalorder %s119, %s120
      %p134 = scmp.eq.s32.totalorder %s23, 1
      %p135 = por %p133, %p134
      %p137 = scmp.ne.s32.totalorder %s120, %s136
      %p138 = scmp.eq.s32.totalorder %s23, 0
      %p139 = por %p137, %p138
      %p140 = scmp.le.s32.totalorder 1, %s17
      %p141 = scmp.lt.s32.totalorder %s17, 3
      %p142 = pnand %p140, %p141
      %p143 = pneg %p142
      // Predicated region
      $region9: #{tpu_custom_call.1} parent=5 // pred_check
        _
      $region10: #{tpu_custom_call.1} parent=5 // pred_check_branch
        %145 = sbr.rel (%p142) target = $region12
      $region11: #{tpu_custom_call.1} parent=5 // pred_region
        %s146 = ssub.s32 %s17, 1
        // Predicated region
        $region13: #{tpu_custom_call.1} parent=11 // pred_check
          %p147 = pneg %p64
        $region14: #{tpu_custom_call.1} parent=11 // pred_check_branch
          %149 = sbr.rel (%p147) target = $region16
        $region15: #{tpu_custom_call.1} parent=11 // pred_region
          %s151 = ssub.s32 64, 64
          %152 = vsyncadd [#allocation5], %s151
          %s154 = sshll.u32 %s1, 4
          %s155 = int_to_ptr.vmem [resolvable:$true] %s154
          %157 = dma.vmem_to_smem %s155, 64, [#allocation6], [#allocation5]
        $region16: #{tpu_custom_call.1} parent=11 // pred_fallthru
          _
        // Predicated region
        $region17: #{tpu_custom_call.1} parent=11 // pred_check
          %p158 = pneg %p85
        $region18: #{tpu_custom_call.1} parent=11 // pred_check_branch
          %160 = sbr.rel (%p158) target = $region20
        $region19: #{tpu_custom_call.1} parent=11 // pred_region
          _
        $region20: #{tpu_custom_call.1} parent=11 // pred_fallthru
          _
        // Predicated region
        $region21: #{tpu_custom_call.1} parent=11 // pred_check
          %p161 = pneg %p106
        $region22: #{tpu_custom_call.1} parent=11 // pred_check_branch
          %163 = sbr.rel (%p161) target = $region24
        $region23: #{tpu_custom_call.1} parent=11 // pred_region
          _
        $region24: #{tpu_custom_call.1} parent=11 // pred_fallthru
          _
      $region12: #{tpu_custom_call.1} parent=5 // pred_fallthru
        _
      %p164 = scmp.lt.s32.totalorder %s17, 2
      // Predicated region
      $region25: #{tpu_custom_call.1} parent=5 // pred_check
        %p165 = pneg %p164
      $region26: #{tpu_custom_call.1} parent=5 // pred_check_branch
        %167 = sbr.rel (%p165) target = $region28
      $region27: #{tpu_custom_call.1} parent=5 // pred_region
        // Predicated region
        $region29: #{tpu_custom_call.1} parent=27 // pred_check
          %p168 = pneg %p37
        $region30: #{tpu_custom_call.1} parent=27 // pred_check_branch
          %170 = sbr.rel (%p168) target = $region32
        $region31: #{tpu_custom_call.1} parent=27 // pred_region
          %s171 = sand.u32 %s27, 1
          %s172 = scalar_lea.sflag [#allocation3], %s171
          %s173 = sand.u32 %s27, 1
          %s174 = smul.addr %s173, 96
          %s175 = scalar_lea.vmem [#allocation2], %s174
          %s177 = ssub.s32 1536, 1536
          %178 = vsyncadd %s172, %s177
          %s179 = smul.addr %s17, 12
          %s180 = smul.addr %s179, 128
          %s181 = scalar_lea.hbm %s0, %s180
          %s182 = sshll.u32 %s175, 4
          %s183 = int_to_ptr.vmem [resolvable:$true] %s182
          %188 = dma.hbm_to_vmem [thread:$0]  %s181, 1536, %s183, %s172, 128, 128, 8
        $region32: #{tpu_custom_call.1} parent=27 // pred_fallthru
          _
      $region28: #{tpu_custom_call.1} parent=5 // pred_fallthru
        _
      %p189 = scmp.le.s32.totalorder 1, %s17
      %p190 = scmp.lt.s32.totalorder %s17, 3
      %p191 = pnand %p189, %p190
      %p192 = pneg %p191
      // Predicated region
      $region33: #{tpu_custom_call.1} parent=5 // pred_check
        _
      $region34: #{tpu_custom_call.1} parent=5 // pred_check_branch
        %194 = sbr.rel (%p191) target = $region36
      $region35: #{tpu_custom_call.1} parent=5 // pred_region
        %s195 = ssub.s32 %s17, 1
        %s196 = sand.u32 %s30, 1
        %s197 = scalar_lea.sflag [#allocation3], %s196
        %s198 = sand.u32 %s30, 1
        %s199 = smul.addr %s198, 96
        %s200 = scalar_lea.vmem [#allocation2], %s199
        // Predicated region
        $region37: #{tpu_custom_call.1} parent=35 // pred_check
          %p201 = pneg %p43
        $region38: #{tpu_custom_call.1} parent=35 // pred_check_branch
          %203 = sbr.rel (%p201) target = $region40
        $region39: #{tpu_custom_call.1} parent=35 // pred_region
          %204 = dma.done %s197, 1536
        $region40: #{tpu_custom_call.1} parent=35 // pred_fallthru
          _
        // Predicated region
        $region41: #{tpu_custom_call.1} parent=35 // pred_check
          %p205 = pneg %p64
        $region42: #{tpu_custom_call.1} parent=35 // pred_check_branch
          %207 = sbr.rel (%p205) target = $region44
        $region43: #{tpu_custom_call.1} parent=35 // pred_region
          %208 = dma.done [#allocation5], 64
        $region44: #{tpu_custom_call.1} parent=35 // pred_fallthru
          _
        %209 = sfence
        %s210 = sand.u32 %s30, 1
        %s211 = scalar_lea.sflag [#allocation3], %s210
        %s212 = sand.u32 %s30, 1
        %s213 = smul.addr %s212, 96
        %s214 = scalar_lea.vmem [#allocation2], %s213
        %p215 = pneg %p43
        %p216 = pneg %p40
        %p217 = pneg %p64
        %p218 = pneg %p61
        %p219 = pneg %p85
        %p220 = pneg %p82
        %p221 = pneg %p106
        %p222 = pneg %p103
        %p223 = pneg %p132
        %p224 = pneg %p129
        %s225 = sand.u32 %s119, 1
        %s226 = scalar_lea.sflag [#allocation4], %s225
        %s227 = sand.u32 %s119, 1
        %s228 = smul.addr %s227, 128
        %s229 = scalar_lea.vmem [#allocation7], %s228
        %v230 = vld [vmem:[%s2] sm:$0xff]
        %v231 = vld [vmem:[%s2 + $0x8] sm:$0xff]
        %v232 = vld [vmem:[%s2 + $0x10] sm:$0xff]
        %v233 = vld [vmem:[%s2 + $0x18] sm:$0xff]
        %v234 = vld [vmem:[%s3] sm:$0xff]
        %v235 = vld [vmem:[%s3 + $0x8] sm:$0xff]
        %s236 = sld [smem:[#allocation6]]
        %v237 = vld [vmem:[%s200] sm:$0xff]
        %v238 = vld [vmem:[%s200 + $0x8] sm:$0xff]
        %v239 = vstv %s236
        %v240 = vmul.f32 %v239, %v237
        %v241 = vmul.f32 %v239, %v238
        %s242 = sld [smem:[#allocation6 + $0x1]]
        %s243 = scalar_lea.vmem %s200, 16 [#allocation2]
        %v244 = vld [vmem:[%s243] sm:$0xff]
        %v245 = vld [vmem:[%s243 + $0x8] sm:$0xff]
        %v246 = vstv %s242
        %v247 = vmul.f32 %v246, %v244
        %v248 = vmul.f32 %v246, %v245
        %v249 = vadd.f32 %v240, %v247
        %v250 = vadd.f32 %v241, %v248
        %s251 = sld [smem:[#allocation6 + $0x2]]
        %s252 = scalar_lea.vmem %s200, 32 [#allocation2]
        %v253 = vld [vmem:[%s252] sm:$0xff]
        %v254 = vld [vmem:[%s252 + $0x8] sm:$0xff]
        %v255 = vstv %s251
        %v256 = vmul.f32 %v255, %v253
        %v257 = vmul.f32 %v255, %v254
        %v258 = vadd.f32 %v249, %v256
        %v259 = vadd.f32 %v250, %v257
        %s260 = sld [smem:[#allocation6 + $0x3]]
        %s261 = scalar_lea.vmem %s200, 48 [#allocation2]
        %v262 = vld [vmem:[%s261] sm:$0xff]
        %v263 = vld [vmem:[%s261 + $0x8] sm:$0xff]
        %v264 = vstv %s260
        %v265 = vmul.f32 %v264, %v262
        %v266 = vmul.f32 %v264, %v263
        %v267 = vadd.f32 %v258, %v265
        %v268 = vadd.f32 %v259, %v266
        %s269 = sld [smem:[#allocation6 + $0x4]]
        %s270 = scalar_lea.vmem %s200, 64 [#allocation2]
        %v271 = vld [vmem:[%s270] sm:$0xff]
        %v272 = vld [vmem:[%s270 + $0x8] sm:$0xff]
        %v273 = vstv %s269
        %v274 = vmul.f32 %v273, %v271
        %v275 = vmul.f32 %v273, %v272
        %v276 = vadd.f32 %v267, %v274
        %v277 = vadd.f32 %v268, %v275
        %s278 = sld [smem:[#allocation6 + $0x5]]
        %s279 = scalar_lea.vmem %s200, 80 [#allocation2]
        %v280 = vld [vmem:[%s279] sm:$0xff]
        %v281 = vld [vmem:[%s279 + $0x8] sm:$0xff]
        %v282 = vstv %s278
        %v283 = vmul.f32 %v282, %v280
        %v284 = vmul.f32 %v282, %v281
        %v285 = vadd.f32 %v276, %v283
        %v286 = vadd.f32 %v277, %v284
        %vm287 = vcmask 130048
        %v289 = vsel %vm287, %v230, 0
        %v292 = vsel %vm287, %v231, 0
        %v295 = vsel %vm287, %v232, 0
        %v298 = vsel %vm287, %v233, 0
        %300 = vmatprep.subr.mxu0 0.0
        %301 = vmatpush1.msra.mxu0 %v285
        %302 = vmatprep.subr.mxu0 0.0
        %303 = vmatpush1.msra.mxu0 %v286
        %304 = vmatprep.subr.mxu0 0.0
        %305 = vmatpush1.msra.mxu0 0.0
        %306 = vmatprep.subr.mxu0 0.0
        %307 = vmatpush1.msra.mxu0 0.0
        %308 = vmatprep.subr.mxu0 0.0
        %309 = vmatpush1.msra.mxu0 0.0
        %310 = vmatprep.subr.mxu0 0.0
        %311 = vmatpush1.msra.mxu0 0.0
        %312 = vmatprep.subr.mxu0 0.0
        %313 = vmatpush1.msra.mxu0 0.0
        %314 = vmatprep.subr.mxu0 0.0
        %315 = vmatpush1.msra.mxu0 0.0
        %316 = vmatprep.subr.mxu0 0.0
        %317 = vmatpush1.msra.mxu0 0.0
        %318 = vmatprep.subr.mxu0 0.0
        %319 = vmatpush1.msra.mxu0 0.0
        %320 = vmatprep.subr.mxu0 0.0
        %321 = vmatpush1.msra.mxu0 0.0
        %322 = vmatprep.subr.mxu0 0.0
        %323 = vmatpush1.msra.mxu0 0.0
        %324 = vmatprep.subr.mxu0 0.0
        %325 = vmatpush1.msra.mxu0 0.0
        %326 = vmatprep.subr.mxu0 0.0
        %327 = vmatpush1.msra.mxu0 0.0
        %328 = vmatprep.subr.mxu0 0.0
        %329 = vmatpush1.msra.mxu0 0.0
        %330 = vmatprep.subr.mxu0 0.0
        %331 = vmatpush1.msra.mxu0 0.0
        %332 = vmatprep.subr.mxu0 0.0
        %333 = vmatpush1.msra.mxu0 0.0
        %334 = vmatprep.subr.mxu0 0.0
        %335 = vmatpush1.msra.mxu0 0.0
        %336 = vmatprep.subr.mxu0 0.0
        %337 = vmatpush1.msra.mxu0 0.0
        %338 = vmatprep.subr.mxu0 0.0
        %339 = vmatpush1.msra.mxu0 0.0
        %340 = vmatprep.subr.mxu0 0.0
        %341 = vmatpush1.msra.mxu0 0.0
        %342 = vmatprep.subr.mxu0 0.0
        %343 = vmatpush1.msra.mxu0 0.0
        %344 = vmatprep.subr.mxu0 0.0
        %345 = vmatpush1.msra.mxu0 0.0
        %346 = vmatprep.subr.mxu0 0.0
        %347 = vmatpush1.msra.mxu0 0.0
        %348 = vmatprep.subr.mxu0 0.0
        %349 = vmatpush1.msra.mxu0 0.0
        %350 = vmatprep.subr.mxu0 0.0
        %351 = vmatpush1.msra.mxu0 0.0
        %352 = vmatprep.subr.mxu0 0.0
        %353 = vmatpush1.msra.mxu0 0.0
        %354 = vmatprep.subr.mxu0 0.0
        %355 = vmatpush1.msra.mxu0 0.0
        %356 = vmatprep.subr.mxu0 0.0
        %357 = vmatpush1.msra.mxu0 0.0
        %358 = vmatprep.subr.mxu0 0.0
        %359 = vmatpush1.msra.mxu0 0.0
        %360 = vmatprep.subr.mxu0 0.0
        %361 = vmatpush1.msra.mxu0 0.0
        %362 = vmatprep.subr.mxu0 0.0
        %363 = vmatpush1.msra.mxu0 0.0
        %364 = vmatprep.mubr.f32.mxu0 0.0
        %365 = vmatmul.mubr.f32.gmra.mrb[0].mxu0 %v289
        %v366 = vpop.f32.mrb[0].mxu0
        %v367 = vadd.f32 0.0, %v366
        %v368 = vpop.f32.mrb[0].mxu0
        %369 = vmatprep.mubr.f32.mxu0 0.0
        %370 = vmatmul.mubr.f32.gmra.mrb[0].mxu0 %v292
        %v371 = vpop.f32.mrb[0].mxu0
        %v372 = vadd.f32 0.0, %v371
        %v373 = vpop.f32.mrb[0].mxu0
        %374 = vmatprep.mubr.f32.mxu0 0.0
        %375 = vmatmul.mubr.f32.gmra.mrb[0].mxu0 %v295
        %v376 = vpop.f32.mrb[0].mxu0
        %v377 = vadd.f32 0.0, %v376
        %v378 = vpop.f32.mrb[0].mxu0
        %379 = vmatprep.mubr.f32.mxu0 0.0
        %380 = vmatmul.mubr.f32.gmra.mrb[0].mxu0 %v298
        %v381 = vpop.f32.mrb[0].mxu0
        %v382 = vadd.f32 0.0, %v381
        %v383 = vpop.f32.mrb[0].mxu0
        %384 = vdwg.mxu0
        %v386 = vsel %vm287, %v367, 0
        %v389 = vsel %vm287, %v372, 0
        %v392 = vsel %vm287, %v377, 0
        %v395 = vsel %vm287, %v382, 0
        %397 = vmatprep.subr.mxu0 0.0
        %398 = vmatpush1.msra.mxu0 %v234
        %399 = vmatprep.subr.mxu0 0.0
        %400 = vmatpush1.msra.mxu0 %v235
        %401 = vmatprep.subr.mxu0 0.0
        %402 = vmatpush1.msra.mxu0 0.0
        %403 = vmatprep.subr.mxu0 0.0
        %404 = vmatpush1.msra.mxu0 0.0
        %405 = vmatprep.subr.mxu0 0.0
        %406 = vmatpush1.msra.mxu0 0.0
        %407 = vmatprep.subr.mxu0 0.0
        %408 = vmatpush1.msra.mxu0 0.0
        %409 = vmatprep.subr.mxu0 0.0
        %410 = vmatpush1.msra.mxu0 0.0
        %411 = vmatprep.subr.mxu0 0.0
        %412 = vmatpush1.msra.mxu0 0.0
        %413 = vmatprep.subr.mxu0 0.0
        %414 = vmatpush1.msra.mxu0 0.0
        %415 = vmatprep.subr.mxu0 0.0
        %416 = vmatpush1.msra.mxu0 0.0
        %417 = vmatprep.subr.mxu0 0.0
        %418 = vmatpush1.msra.mxu0 0.0
        %419 = vmatprep.subr.mxu0 0.0
        %420 = vmatpush1.msra.mxu0 0.0
        %421 = vmatprep.subr.mxu0 0.0
        %422 = vmatpush1.msra.mxu0 0.0
        %423 = vmatprep.subr.mxu0 0.0
        %424 = vmatpush1.msra.mxu0 0.0
        %425 = vmatprep.subr.mxu0 0.0
        %426 = vmatpush1.msra.mxu0 0.0
        %427 = vmatprep.subr.mxu0 0.0
        %428 = vmatpush1.msra.mxu0 0.0
        %429 = vmatprep.subr.mxu0 0.0
        %430 = vmatpush1.msra.mxu0 0.0
        %431 = vmatprep.subr.mxu0 0.0
        %432 = vmatpush1.msra.mxu0 0.0
        %433 = vmatprep.subr.mxu0 0.0
        %434 = vmatpush1.msra.mxu0 0.0
        %435 = vmatprep.subr.mxu0 0.0
        %436 = vmatpush1.msra.mxu0 0.0
        %437 = vmatprep.subr.mxu0 0.0
        %438 = vmatpush1.msra.mxu0 0.0
        %439 = vmatprep.subr.mxu0 0.0
        %440 = vmatpush1.msra.mxu0 0.0
        %441 = vmatprep.subr.mxu0 0.0
        %442 = vmatpush1.msra.mxu0 0.0
        %443 = vmatprep.subr.mxu0 0.0
        %444 = vmatpush1.msra.mxu0 0.0
        %445 = vmatprep.subr.mxu0 0.0
        %446 = vmatpush1.msra.mxu0 0.0
        %447 = vmatprep.subr.mxu0 0.0
        %448 = vmatpush1.msra.mxu0 0.0
        %449 = vmatprep.subr.mxu0 0.0
        %450 = vmatpush1.msra.mxu0 0.0
        %451 = vmatprep.subr.mxu0 0.0
        %452 = vmatpush1.msra.mxu0 0.0
        %453 = vmatprep.subr.mxu0 0.0
        %454 = vmatpush1.msra.mxu0 0.0
        %455 = vmatprep.subr.mxu0 0.0
        %456 = vmatpush1.msra.mxu0 0.0
        %457 = vmatprep.subr.mxu0 0.0
        %458 = vmatpush1.msra.mxu0 0.0
        %459 = vmatprep.subr.mxu0 0.0
        %460 = vmatpush1.msra.mxu0 0.0
        %461 = vmatprep.mubr.f32.mxu0 0.0
        %462 = vmatmul.mubr.f32.gmra.mrb[0].mxu0 %v386
        %v463 = vpop.f32.mrb[0].mxu0
        %v464 = vadd.f32 0.0, %v463
        %v465 = vpop.f32.mrb[0].mxu0
        %466 = vmatprep.mubr.f32.mxu0 0.0
        %467 = vmatmul.mubr.f32.gmra.mrb[0].mxu0 %v389
        %v468 = vpop.f32.mrb[0].mxu0
        %v469 = vadd.f32 0.0, %v468
        %v470 = vpop.f32.mrb[0].mxu0
        %471 = vmatprep.mubr.f32.mxu0 0.0
        %472 = vmatmul.mubr.f32.gmra.mrb[0].mxu0 %v392
        %v473 = vpop.f32.mrb[0].mxu0
        %v474 = vadd.f32 0.0, %v473
        %v475 = vpop.f32.mrb[0].mxu0
        %476 = vmatprep.mubr.f32.mxu0 0.0
        %477 = vmatmul.mubr.f32.gmra.mrb[0].mxu0 %v395
        %v478 = vpop.f32.mrb[0].mxu0
        %v479 = vadd.f32 0.0, %v478
        %v480 = vpop.f32.mrb[0].mxu0
        %481 = vdwg.mxu0
        %vm482 = vcmask 261120
        %483 = vst.msk [vmem:[%s229] sm:$0xff] %vm482, %v464
        %484 = vst.msk [vmem:[%s229 + $0x8] sm:$0xff] %vm482, %v469
        %485 = vst.msk [vmem:[%s229 + $0x10] sm:$0xff] %vm482, %v474
        %486 = vst.msk [vmem:[%s229 + $0x18] sm:$0xff] %vm482, %v479
        %s487 = sld [smem:[#allocation6 + $0x80]]
        %v488 = vld [vmem:[%s200] sm:$0xff]
        %v489 = vld [vmem:[%s200 + $0x8] sm:$0xff]
        %v490 = vstv %s487
        %v491 = vmul.f32 %v490, %v488
        %v492 = vmul.f32 %v490, %v489
        %s493 = sld [smem:[#allocation6 + $0x81]]
        %v494 = vld [vmem:[%s243] sm:$0xff]
        %v495 = vld [vmem:[%s243 + $0x8] sm:$0xff]
        %v496 = vstv %s493
        %v497 = vmul.f32 %v496, %v494
        %v498 = vmul.f32 %v496, %v495
        %v499 = vadd.f32 %v491, %v497
        %v500 = vadd.f32 %v492, %v498
        %s501 = sld [smem:[#allocation6 + $0x82]]
        %v502 = vld [vmem:[%s252] sm:$0xff]
        %v503 = vld [vmem:[%s252 + $0x8] sm:$0xff]
        %v504 = vstv %s501
        %v505 = vmul.f32 %v504, %v502
        %v506 = vmul.f32 %v504, %v503
        %v507 = vadd.f32 %v499, %v505
        %v508 = vadd.f32 %v500, %v506
        %s509 = sld [smem:[#allocation6 + $0x83]]
        %v510 = vld [vmem:[%s261] sm:$0xff]
        %v511 = vld [vmem:[%s261 + $0x8] sm:$0xff]
        %v512 = vstv %s509
        %v513 = vmul.f32 %v512, %v510
        %v514 = vmul.f32 %v512, %v511
        %v515 = vadd.f32 %v507, %v513
        %v516 = vadd.f32 %v508, %v514
        %s517 = sld [smem:[#allocation6 + $0x84]]
        %v518 = vld [vmem:[%s270] sm:$0xff]
        %v519 = vld [vmem:[%s270 + $0x8] sm:$0xff]
        %v520 = vstv %s517
        %v521 = vmul.f32 %v520, %v518
        %v522 = vmul.f32 %v520, %v519
        %v523 = vadd.f32 %v515, %v521
        %v524 = vadd.f32 %v516, %v522
        %s525 = sld [smem:[#allocation6 + $0x85]]
        %v526 = vld [vmem:[%s279] sm:$0xff]
        %v527 = vld [vmem:[%s279 + $0x8] sm:$0xff]
        %v528 = vstv %s525
        %v529 = vmul.f32 %v528, %v526
        %v530 = vmul.f32 %v528, %v527
        %v531 = vadd.f32 %v523, %v529
        %v532 = vadd.f32 %v524, %v530
        %533 = vmatprep.subr.mxu0 0.0
        %534 = vmatpush1.msra.mxu0 %v531
        %535 = vmatprep.subr.mxu0 0.0
        %536 = vmatpush1.msra.mxu0 %v532
        %537 = vmatprep.subr.mxu0 0.0
        %538 = vmatpush1.msra.mxu0 0.0
        %539 = vmatprep.subr.mxu0 0.0
        %540 = vmatpush1.msra.mxu0 0.0
        %541 = vmatprep.subr.mxu0 0.0
        %542 = vmatpush1.msra.mxu0 0.0
        %543 = vmatprep.subr.mxu0 0.0
        %544 = vmatpush1.msra.mxu0 0.0
        %545 = vmatprep.subr.mxu0 0.0
        %546 = vmatpush1.msra.mxu0 0.0
        %547 = vmatprep.subr.mxu0 0.0
        %548 = vmatpush1.msra.mxu0 0.0
        %549 = vmatprep.subr.mxu0 0.0
        %550 = vmatpush1.msra.mxu0 0.0
        %551 = vmatprep.subr.mxu0 0.0
        %552 = vmatpush1.msra.mxu0 0.0
        %553 = vmatprep.subr.mxu0 0.0
        %554 = vmatpush1.msra.mxu0 0.0
        %555 = vmatprep.subr.mxu0 0.0
        %556 = vmatpush1.msra.mxu0 0.0
        %557 = vmatprep.subr.mxu0 0.0
        %558 = vmatpush1.msra.mxu0 0.0
        %559 = vmatprep.subr.mxu0 0.0
        %560 = vmatpush1.msra.mxu0 0.0
        %561 = vmatprep.subr.mxu0 0.0
        %562 = vmatpush1.msra.mxu0 0.0
        %563 = vmatprep.subr.mxu0 0.0
        %564 = vmatpush1.msra.mxu0 0.0
        %565 = vmatprep.subr.mxu0 0.0
        %566 = vmatpush1.msra.mxu0 0.0
        %567 = vmatprep.subr.mxu0 0.0
        %568 = vmatpush1.msra.mxu0 0.0
        %569 = vmatprep.subr.mxu0 0.0
        %570 = vmatpush1.msra.mxu0 0.0
        %571 = vmatprep.subr.mxu0 0.0
        %572 = vmatpush1.msra.mxu0 0.0
        %573 = vmatprep.subr.mxu0 0.0
        %574 = vmatpush1.msra.mxu0 0.0
        %575 = vmatprep.subr.mxu0 0.0
        %576 = vmatpush1.msra.mxu0 0.0
        %577 = vmatprep.subr.mxu0 0.0
        %578 = vmatpush1.msra.mxu0 0.0
        %579 = vmatprep.subr.mxu0 0.0
        %580 = vmatpush1.msra.mxu0 0.0
        %581 = vmatprep.subr.mxu0 0.0
        %582 = vmatpush1.msra.mxu0 0.0
        %583 = vmatprep.subr.mxu0 0.0
        %584 = vmatpush1.msra.mxu0 0.0
        %585 = vmatprep.subr.mxu0 0.0
        %586 = vmatpush1.msra.mxu0 0.0
        %587 = vmatprep.subr.mxu0 0.0
        %588 = vmatpush1.msra.mxu0 0.0
        %589 = vmatprep.subr.mxu0 0.0
        %590 = vmatpush1.msra.mxu0 0.0
        %591 = vmatprep.subr.mxu0 0.0
        %592 = vmatpush1.msra.mxu0 0.0
        %593 = vmatprep.subr.mxu0 0.0
        %594 = vmatpush1.msra.mxu0 0.0
        %595 = vmatprep.subr.mxu0 0.0
        %596 = vmatpush1.msra.mxu0 0.0
        %597 = vmatprep.mubr.f32.mxu0 0.0
        %598 = vmatmul.mubr.f32.gmra.mrb[0].mxu0 %v289
        %v599 = vpop.f32.mrb[0].mxu0
        %v600 = vadd.f32 0.0, %v599
        %v601 = vpop.f32.mrb[0].mxu0
        %602 = vmatprep.mubr.f32.mxu0 0.0
        %603 = vmatmul.mubr.f32.gmra.mrb[0].mxu0 %v292
        %v604 = vpop.f32.mrb[0].mxu0
        %v605 = vadd.f32 0.0, %v604
        %v606 = vpop.f32.mrb[0].mxu0
        %607 = vmatprep.mubr.f32.mxu0 0.0
        %608 = vmatmul.mubr.f32.gmra.mrb[0].mxu0 %v295
        %v609 = vpop.f32.mrb[0].mxu0
        %v610 = vadd.f32 0.0, %v609
        %v611 = vpop.f32.mrb[0].mxu0
        %612 = vmatprep.mubr.f32.mxu0 0.0
        %613 = vmatmul.mubr.f32.gmra.mrb[0].mxu0 %v298
        %v614 = vpop.f32.mrb[0].mxu0
        %v615 = vadd.f32 0.0, %v614
        %v616 = vpop.f32.mrb[0].mxu0
        %617 = vdwg.mxu0
        %v619 = vsel %vm287, %v600, 0
        %v622 = vsel %vm287, %v605, 0
        %v625 = vsel %vm287, %v610, 0
        %v628 = vsel %vm287, %v615, 0
        %630 = vmatprep.subr.mxu0 0.0
        %631 = vmatpush1.msra.mxu0 %v234
        %632 = vmatprep.subr.mxu0 0.0
        %633 = vmatpush1.msra.mxu0 %v235
        %634 = vmatprep.subr.mxu0 0.0
        %635 = vmatpush1.msra.mxu0 0.0
        %636 = vmatprep.subr.mxu0 0.0
        %637 = vmatpush1.msra.mxu0 0.0
        %638 = vmatprep.subr.mxu0 0.0
        %639 = vmatpush1.msra.mxu0 0.0
        %640 = vmatprep.subr.mxu0 0.0
        %641 = vmatpush1.msra.mxu0 0.0
        %642 = vmatprep.subr.mxu0 0.0
        %643 = vmatpush1.msra.mxu0 0.0
        %644 = vmatprep.subr.mxu0 0.0
        %645 = vmatpush1.msra.mxu0 0.0
        %646 = vmatprep.subr.mxu0 0.0
        %647 = vmatpush1.msra.mxu0 0.0
        %648 = vmatprep.subr.mxu0 0.0
        %649 = vmatpush1.msra.mxu0 0.0
        %650 = vmatprep.subr.mxu0 0.0
        %651 = vmatpush1.msra.mxu0 0.0
        %652 = vmatprep.subr.mxu0 0.0
        %653 = vmatpush1.msra.mxu0 0.0
        %654 = vmatprep.subr.mxu0 0.0
        %655 = vmatpush1.msra.mxu0 0.0
        %656 = vmatprep.subr.mxu0 0.0
        %657 = vmatpush1.msra.mxu0 0.0
        %658 = vmatprep.subr.mxu0 0.0
        %659 = vmatpush1.msra.mxu0 0.0
        %660 = vmatprep.subr.mxu0 0.0
        %661 = vmatpush1.msra.mxu0 0.0
        %662 = vmatprep.subr.mxu0 0.0
        %663 = vmatpush1.msra.mxu0 0.0
        %664 = vmatprep.subr.mxu0 0.0
        %665 = vmatpush1.msra.mxu0 0.0
        %666 = vmatprep.subr.mxu0 0.0
        %667 = vmatpush1.msra.mxu0 0.0
        %668 = vmatprep.subr.mxu0 0.0
        %669 = vmatpush1.msra.mxu0 0.0
        %670 = vmatprep.subr.mxu0 0.0
        %671 = vmatpush1.msra.mxu0 0.0
        %672 = vmatprep.subr.mxu0 0.0
        %673 = vmatpush1.msra.mxu0 0.0
        %674 = vmatprep.subr.mxu0 0.0
        %675 = vmatpush1.msra.mxu0 0.0
        %676 = vmatprep.subr.mxu0 0.0
        %677 = vmatpush1.msra.mxu0 0.0
        %678 = vmatprep.subr.mxu0 0.0
        %679 = vmatpush1.msra.mxu0 0.0
        %680 = vmatprep.subr.mxu0 0.0
        %681 = vmatpush1.msra.mxu0 0.0
        %682 = vmatprep.subr.mxu0 0.0
        %683 = vmatpush1.msra.mxu0 0.0
        %684 = vmatprep.subr.mxu0 0.0
        %685 = vmatpush1.msra.mxu0 0.0
        %686 = vmatprep.subr.mxu0 0.0
        %687 = vmatpush1.msra.mxu0 0.0
        %688 = vmatprep.subr.mxu0 0.0
        %689 = vmatpush1.msra.mxu0 0.0
        %690 = vmatprep.subr.mxu0 0.0
        %691 = vmatpush1.msra.mxu0 0.0
        %692 = vmatprep.subr.mxu0 0.0
        %693 = vmatpush1.msra.mxu0 0.0
        %694 = vmatprep.mubr.f32.mxu0 0.0
        %695 = vmatmul.mubr.f32.gmra.mrb[0].mxu0 %v619
        %v696 = vpop.f32.mrb[0].mxu0
        %v697 = vadd.f32 0.0, %v696
        %v698 = vpop.f32.mrb[0].mxu0
        %699 = vmatprep.mubr.f32.mxu0 0.0
        %700 = vmatmul.mubr.f32.gmra.mrb[0].mxu0 %v622
        %v701 = vpop.f32.mrb[0].mxu0
        %v702 = vadd.f32 0.0, %v701
        %v703 = vpop.f32.mrb[0].mxu0
        %704 = vmatprep.mubr.f32.mxu0 0.0
        %705 = vmatmul.mubr.f32.gmra.mrb[0].mxu0 %v625
        %v706 = vpop.f32.mrb[0].mxu0
        %v707 = vadd.f32 0.0, %v706
        %v708 = vpop.f32.mrb[0].mxu0
        %709 = vmatprep.mubr.f32.mxu0 0.0
        %710 = vmatmul.mubr.f32.gmra.mrb[0].mxu0 %v628
        %v711 = vpop.f32.mrb[0].mxu0
        %v712 = vadd.f32 0.0, %v711
        %v713 = vpop.f32.mrb[0].mxu0
        %714 = vdwg.mxu0
        %s715 = scalar_lea.vmem %s229, 32 [#allocation7]
        %716 = vst.msk [vmem:[%s715] sm:$0xff] %vm482, %v697
        %717 = vst.msk [vmem:[%s715 + $0x8] sm:$0xff] %vm482, %v702
        %718 = vst.msk [vmem:[%s715 + $0x10] sm:$0xff] %vm482, %v707
        %719 = vst.msk [vmem:[%s715 + $0x18] sm:$0xff] %vm482, %v712
        %s720 = sld [smem:[#allocation6 + $0x100]]
        %v721 = vld [vmem:[%s200] sm:$0xff]
        %v722 = vld [vmem:[%s200 + $0x8] sm:$0xff]
        %v723 = vstv %s720
        %v724 = vmul.f32 %v723, %v721
        %v725 = vmul.f32 %v723, %v722
        %s726 = sld [smem:[#allocation6 + $0x101]]
        %v727 = vld [vmem:[%s243] sm:$0xff]
        %v728 = vld [vmem:[%s243 + $0x8] sm:$0xff]
        %v729 = vstv %s726
        %v730 = vmul.f32 %v729, %v727
        %v731 = vmul.f32 %v729, %v728
        %v732 = vadd.f32 %v724, %v730
        %v733 = vadd.f32 %v725, %v731
        %s734 = sld [smem:[#allocation6 + $0x102]]
        %v735 = vld [vmem:[%s252] sm:$0xff]
        %v736 = vld [vmem:[%s252 + $0x8] sm:$0xff]
        %v737 = vstv %s734
        %v738 = vmul.f32 %v737, %v735
        %v739 = vmul.f32 %v737, %v736
        %v740 = vadd.f32 %v732, %v738
        %v741 = vadd.f32 %v733, %v739
        %s742 = sld [smem:[#allocation6 + $0x103]]
        %v743 = vld [vmem:[%s261] sm:$0xff]
        %v744 = vld [vmem:[%s261 + $0x8] sm:$0xff]
        %v745 = vstv %s742
        %v746 = vmul.f32 %v745, %v743
        %v747 = vmul.f32 %v745, %v744
        %v748 = vadd.f32 %v740, %v746
        %v749 = vadd.f32 %v741, %v747
        %s750 = sld [smem:[#allocation6 + $0x104]]
        %v751 = vld [vmem:[%s270] sm:$0xff]
        %v752 = vld [vmem:[%s270 + $0x8] sm:$0xff]
        %v753 = vstv %s750
        %v754 = vmul.f32 %v753, %v751
        %v755 = vmul.f32 %v753, %v752
        %v756 = vadd.f32 %v748, %v754
        %v757 = vadd.f32 %v749, %v755
        %s758 = sld [smem:[#allocation6 + $0x105]]
        %v759 = vld [vmem:[%s279] sm:$0xff]
        %v760 = vld [vmem:[%s279 + $0x8] sm:$0xff]
        %v761 = vstv %s758
        %v762 = vmul.f32 %v761, %v759
        %v763 = vmul.f32 %v761, %v760
        %v764 = vadd.f32 %v756, %v762
        %v765 = vadd.f32 %v757, %v763
        %766 = vmatprep.subr.mxu0 0.0
        %767 = vmatpush1.msra.mxu0 %v764
        %768 = vmatprep.subr.mxu0 0.0
        %769 = vmatpush1.msra.mxu0 %v765
        %770 = vmatprep.subr.mxu0 0.0
        %771 = vmatpush1.msra.mxu0 0.0
        %772 = vmatprep.subr.mxu0 0.0
        %773 = vmatpush1.msra.mxu0 0.0
        %774 = vmatprep.subr.mxu0 0.0
        %775 = vmatpush1.msra.mxu0 0.0
        %776 = vmatprep.subr.mxu0 0.0
        %777 = vmatpush1.msra.mxu0 0.0
        %778 = vmatprep.subr.mxu0 0.0
        %779 = vmatpush1.msra.mxu0 0.0
        %780 = vmatprep.subr.mxu0 0.0
        %781 = vmatpush1.msra.mxu0 0.0
        %782 = vmatprep.subr.mxu0 0.0
        %783 = vmatpush1.msra.mxu0 0.0
        %784 = vmatprep.subr.mxu0 0.0
        %785 = vmatpush1.msra.mxu0 0.0
        %786 = vmatprep.subr.mxu0 0.0
        %787 = vmatpush1.msra.mxu0 0.0
        %788 = vmatprep.subr.mxu0 0.0
        %789 = vmatpush1.msra.mxu0 0.0
        %790 = vmatprep.subr.mxu0 0.0
        %791 = vmatpush1.msra.mxu0 0.0
        %792 = vmatprep.subr.mxu0 0.0
        %793 = vmatpush1.msra.mxu0 0.0
        %794 = vmatprep.subr.mxu0 0.0
        %795 = vmatpush1.msra.mxu0 0.0
        %796 = vmatprep.subr.mxu0 0.0
        %797 = vmatpush1.msra.mxu0 0.0
        %798 = vmatprep.subr.mxu0 0.0
        %799 = vmatpush1.msra.mxu0 0.0
        %800 = vmatprep.subr.mxu0 0.0
        %801 = vmatpush1.msra.mxu0 0.0
        %802 = vmatprep.subr.mxu0 0.0
        %803 = vmatpush1.msra.mxu0 0.0
        %804 = vmatprep.subr.mxu0 0.0
        %805 = vmatpush1.msra.mxu0 0.0
        %806 = vmatprep.subr.mxu0 0.0
        %807 = vmatpush1.msra.mxu0 0.0
        %808 = vmatprep.subr.mxu0 0.0
        %809 = vmatpush1.msra.mxu0 0.0
        %810 = vmatprep.subr.mxu0 0.0
        %811 = vmatpush1.msra.mxu0 0.0
        %812 = vmatprep.subr.mxu0 0.0
        %813 = vmatpush1.msra.mxu0 0.0
        %814 = vmatprep.subr.mxu0 0.0
        %815 = vmatpush1.msra.mxu0 0.0
        %816 = vmatprep.subr.mxu0 0.0
        %817 = vmatpush1.msra.mxu0 0.0
        %818 = vmatprep.subr.mxu0 0.0
        %819 = vmatpush1.msra.mxu0 0.0
        %820 = vmatprep.subr.mxu0 0.0
        %821 = vmatpush1.msra.mxu0 0.0
        %822 = vmatprep.subr.mxu0 0.0
        %823 = vmatpush1.msra.mxu0 0.0
        %824 = vmatprep.subr.mxu0 0.0
        %825 = vmatpush1.msra.mxu0 0.0
        %826 = vmatprep.subr.mxu0 0.0
        %827 = vmatpush1.msra.mxu0 0.0
        %828 = vmatprep.subr.mxu0 0.0
        %829 = vmatpush1.msra.mxu0 0.0
        %830 = vmatprep.mubr.f32.mxu0 0.0
        %831 = vmatmul.mubr.f32.gmra.mrb[0].mxu0 %v289
        %v832 = vpop.f32.mrb[0].mxu0
        %v833 = vadd.f32 0.0, %v832
        %v834 = vpop.f32.mrb[0].mxu0
        %835 = vmatprep.mubr.f32.mxu0 0.0
        %836 = vmatmul.mubr.f32.gmra.mrb[0].mxu0 %v292
        %v837 = vpop.f32.mrb[0].mxu0
        %v838 = vadd.f32 0.0, %v837
        %v839 = vpop.f32.mrb[0].mxu0
        %840 = vmatprep.mubr.f32.mxu0 0.0
        %841 = vmatmul.mubr.f32.gmra.mrb[0].mxu0 %v295
        %v842 = vpop.f32.mrb[0].mxu0
        %v843 = vadd.f32 0.0, %v842
        %v844 = vpop.f32.mrb[0].mxu0
        %845 = vmatprep.mubr.f32.mxu0 0.0
        %846 = vmatmul.mubr.f32.gmra.mrb[0].mxu0 %v298
        %v847 = vpop.f32.mrb[0].mxu0
        %v848 = vadd.f32 0.0, %v847
        %v849 = vpop.f32.mrb[0].mxu0
        %850 = vdwg.mxu0
        %v852 = vsel %vm287, %v833, 0
        %v855 = vsel %vm287, %v838, 0
        %v858 = vsel %vm287, %v843, 0
        %v861 = vsel %vm287, %v848, 0
        %863 = vmatprep.subr.mxu0 0.0
        %864 = vmatpush1.msra.mxu0 %v234
        %865 = vmatprep.subr.mxu0 0.0
        %866 = vmatpush1.msra.mxu0 %v235
        %867 = vmatprep.subr.mxu0 0.0
        %868 = vmatpush1.msra.mxu0 0.0
        %869 = vmatprep.subr.mxu0 0.0
        %870 = vmatpush1.msra.mxu0 0.0
        %871 = vmatprep.subr.mxu0 0.0
        %872 = vmatpush1.msra.mxu0 0.0
        %873 = vmatprep.subr.mxu0 0.0
        %874 = vmatpush1.msra.mxu0 0.0
        %875 = vmatprep.subr.mxu0 0.0
        %876 = vmatpush1.msra.mxu0 0.0
        %877 = vmatprep.subr.mxu0 0.0
        %878 = vmatpush1.msra.mxu0 0.0
        %879 = vmatprep.subr.mxu0 0.0
        %880 = vmatpush1.msra.mxu0 0.0
        %881 = vmatprep.subr.mxu0 0.0
        %882 = vmatpush1.msra.mxu0 0.0
        %883 = vmatprep.subr.mxu0 0.0
        %884 = vmatpush1.msra.mxu0 0.0
        %885 = vmatprep.subr.mxu0 0.0
        %886 = vmatpush1.msra.mxu0 0.0
        %887 = vmatprep.subr.mxu0 0.0
        %888 = vmatpush1.msra.mxu0 0.0
        %889 = vmatprep.subr.mxu0 0.0
        %890 = vmatpush1.msra.mxu0 0.0
        %891 = vmatprep.subr.mxu0 0.0
        %892 = vmatpush1.msra.mxu0 0.0
        %893 = vmatprep.subr.mxu0 0.0
        %894 = vmatpush1.msra.mxu0 0.0
        %895 = vmatprep.subr.mxu0 0.0
        %896 = vmatpush1.msra.mxu0 0.0
        %897 = vmatprep.subr.mxu0 0.0
        %898 = vmatpush1.msra.mxu0 0.0
        %899 = vmatprep.subr.mxu0 0.0
        %900 = vmatpush1.msra.mxu0 0.0
        %901 = vmatprep.subr.mxu0 0.0
        %902 = vmatpush1.msra.mxu0 0.0
        %903 = vmatprep.subr.mxu0 0.0
        %904 = vmatpush1.msra.mxu0 0.0
        %905 = vmatprep.subr.mxu0 0.0
        %906 = vmatpush1.msra.mxu0 0.0
        %907 = vmatprep.subr.mxu0 0.0
        %908 = vmatpush1.msra.mxu0 0.0
        %909 = vmatprep.subr.mxu0 0.0
        %910 = vmatpush1.msra.mxu0 0.0
        %911 = vmatprep.subr.mxu0 0.0
        %912 = vmatpush1.msra.mxu0 0.0
        %913 = vmatprep.subr.mxu0 0.0
        %914 = vmatpush1.msra.mxu0 0.0
        %915 = vmatprep.subr.mxu0 0.0
        %916 = vmatpush1.msra.mxu0 0.0
        %917 = vmatprep.subr.mxu0 0.0
        %918 = vmatpush1.msra.mxu0 0.0
        %919 = vmatprep.subr.mxu0 0.0
        %920 = vmatpush1.msra.mxu0 0.0
        %921 = vmatprep.subr.mxu0 0.0
        %922 = vmatpush1.msra.mxu0 0.0
        %923 = vmatprep.subr.mxu0 0.0
        %924 = vmatpush1.msra.mxu0 0.0
        %925 = vmatprep.subr.mxu0 0.0
        %926 = vmatpush1.msra.mxu0 0.0
        %927 = vmatprep.mubr.f32.mxu0 0.0
        %928 = vmatmul.mubr.f32.gmra.mrb[0].mxu0 %v852
        %v929 = vpop.f32.mrb[0].mxu0
        %v930 = vadd.f32 0.0, %v929
        %v931 = vpop.f32.mrb[0].mxu0
        %932 = vmatprep.mubr.f32.mxu0 0.0
        %933 = vmatmul.mubr.f32.gmra.mrb[0].mxu0 %v855
        %v934 = vpop.f32.mrb[0].mxu0
        %v935 = vadd.f32 0.0, %v934
        %v936 = vpop.f32.mrb[0].mxu0
        %937 = vmatprep.mubr.f32.mxu0 0.0
        %938 = vmatmul.mubr.f32.gmra.mrb[0].mxu0 %v858
        %v939 = vpop.f32.mrb[0].mxu0
        %v940 = vadd.f32 0.0, %v939
        %v941 = vpop.f32.mrb[0].mxu0
        %942 = vmatprep.mubr.f32.mxu0 0.0
        %943 = vmatmul.mubr.f32.gmra.mrb[0].mxu0 %v861
        %v944 = vpop.f32.mrb[0].mxu0
        %v945 = vadd.f32 0.0, %v944
        %v946 = vpop.f32.mrb[0].mxu0
        %947 = vdwg.mxu0
        %s948 = scalar_lea.vmem %s229, 64 [#allocation7]
        %949 = vst.msk [vmem:[%s948] sm:$0xff] %vm482, %v930
        %950 = vst.msk [vmem:[%s948 + $0x8] sm:$0xff] %vm482, %v935
        %951 = vst.msk [vmem:[%s948 + $0x10] sm:$0xff] %vm482, %v940
        %952 = vst.msk [vmem:[%s948 + $0x18] sm:$0xff] %vm482, %v945
        %s953 = sld [smem:[#allocation6 + $0x180]]
        %v954 = vld [vmem:[%s200] sm:$0xff]
        %v955 = vld [vmem:[%s200 + $0x8] sm:$0xff]
        %v956 = vstv %s953
        %v957 = vmul.f32 %v956, %v954
        %v958 = vmul.f32 %v956, %v955
        %s959 = sld [smem:[#allocation6 + $0x181]]
        %v960 = vld [vmem:[%s243] sm:$0xff]
        %v961 = vld [vmem:[%s243 + $0x8] sm:$0xff]
        %v962 = vstv %s959
        %v963 = vmul.f32 %v962, %v960
        %v964 = vmul.f32 %v962, %v961
        %v965 = vadd.f32 %v957, %v963
        %v966 = vadd.f32 %v958, %v964
        %s967 = sld [smem:[#allocation6 + $0x182]]
        %v968 = vld [vmem:[%s252] sm:$0xff]
        %v969 = vld [vmem:[%s252 + $0x8] sm:$0xff]
        %v970 = vstv %s967
        %v971 = vmul.f32 %v970, %v968
        %v972 = vmul.f32 %v970, %v969
        %v973 = vadd.f32 %v965, %v971
        %v974 = vadd.f32 %v966, %v972
        %s975 = sld [smem:[#allocation6 + $0x183]]
        %v976 = vld [vmem:[%s261] sm:$0xff]
        %v977 = vld [vmem:[%s261 + $0x8] sm:$0xff]
        %v978 = vstv %s975
        %v979 = vmul.f32 %v978, %v976
        %v980 = vmul.f32 %v978, %v977
        %v981 = vadd.f32 %v973, %v979
        %v982 = vadd.f32 %v974, %v980
        %s983 = sld [smem:[#allocation6 + $0x184]]
        %v984 = vld [vmem:[%s270] sm:$0xff]
        %v985 = vld [vmem:[%s270 + $0x8] sm:$0xff]
        %v986 = vstv %s983
        %v987 = vmul.f32 %v986, %v984
        %v988 = vmul.f32 %v986, %v985
        %v989 = vadd.f32 %v981, %v987
        %v990 = vadd.f32 %v982, %v988
        %s991 = sld [smem:[#allocation6 + $0x185]]
        %v992 = vld [vmem:[%s279] sm:$0xff]
        %v993 = vld [vmem:[%s279 + $0x8] sm:$0xff]
        %v994 = vstv %s991
        %v995 = vmul.f32 %v994, %v992
        %v996 = vmul.f32 %v994, %v993
        %v997 = vadd.f32 %v989, %v995
        %v998 = vadd.f32 %v990, %v996
        %999 = vmatprep.subr.mxu0 0.0
        %1000 = vmatpush1.msra.mxu0 %v997
        %1001 = vmatprep.subr.mxu0 0.0
        %1002 = vmatpush1.msra.mxu0 %v998
        %1003 = vmatprep.subr.mxu0 0.0
        %1004 = vmatpush1.msra.mxu0 0.0
        %1005 = vmatprep.subr.mxu0 0.0
        %1006 = vmatpush1.msra.mxu0 0.0
        %1007 = vmatprep.subr.mxu0 0.0
        %1008 = vmatpush1.msra.mxu0 0.0
        %1009 = vmatprep.subr.mxu0 0.0
        %1010 = vmatpush1.msra.mxu0 0.0
        %1011 = vmatprep.subr.mxu0 0.0
        %1012 = vmatpush1.msra.mxu0 0.0
        %1013 = vmatprep.subr.mxu0 0.0
        %1014 = vmatpush1.msra.mxu0 0.0
        %1015 = vmatprep.subr.mxu0 0.0
        %1016 = vmatpush1.msra.mxu0 0.0
        %1017 = vmatprep.subr.mxu0 0.0
        %1018 = vmatpush1.msra.mxu0 0.0
        %1019 = vmatprep.subr.mxu0 0.0
        %1020 = vmatpush1.msra.mxu0 0.0
        %1021 = vmatprep.subr.mxu0 0.0
        %1022 = vmatpush1.msra.mxu0 0.0
        %1023 = vmatprep.subr.mxu0 0.0
        %1024 = vmatpush1.msra.mxu0 0.0
        %1025 = vmatprep.subr.mxu0 0.0
        %1026 = vmatpush1.msra.mxu0 0.0
        %1027 = vmatprep.subr.mxu0 0.0
        %1028 = vmatpush1.msra.mxu0 0.0
        %1029 = vmatprep.subr.mxu0 0.0
        %1030 = vmatpush1.msra.mxu0 0.0
        %1031 = vmatprep.subr.mxu0 0.0
        %1032 = vmatpush1.msra.mxu0 0.0
        %1033 = vmatprep.subr.mxu0 0.0
        %1034 = vmatpush1.msra.mxu0 0.0
        %1035 = vmatprep.subr.mxu0 0.0
        %1036 = vmatpush1.msra.mxu0 0.0
        %1037 = vmatprep.subr.mxu0 0.0
        %1038 = vmatpush1.msra.mxu0 0.0
        %1039 = vmatprep.subr.mxu0 0.0
        %1040 = vmatpush1.msra.mxu0 0.0
        %1041 = vmatprep.subr.mxu0 0.0
        %1042 = vmatpush1.msra.mxu0 0.0
        %1043 = vmatprep.subr.mxu0 0.0
        %1044 = vmatpush1.msra.mxu0 0.0
        %1045 = vmatprep.subr.mxu0 0.0
        %1046 = vmatpush1.msra.mxu0 0.0
        %1047 = vmatprep.subr.mxu0 0.0
        %1048 = vmatpush1.msra.mxu0 0.0
        %1049 = vmatprep.subr.mxu0 0.0
        %1050 = vmatpush1.msra.mxu0 0.0
        %1051 = vmatprep.subr.mxu0 0.0
        %1052 = vmatpush1.msra.mxu0 0.0
        %1053 = vmatprep.subr.mxu0 0.0
        %1054 = vmatpush1.msra.mxu0 0.0
        %1055 = vmatprep.subr.mxu0 0.0
        %1056 = vmatpush1.msra.mxu0 0.0
        %1057 = vmatprep.subr.mxu0 0.0
        %1058 = vmatpush1.msra.mxu0 0.0
        %1059 = vmatprep.subr.mxu0 0.0
        %1060 = vmatpush1.msra.mxu0 0.0
        %1061 = vmatprep.subr.mxu0 0.0
        %1062 = vmatpush1.msra.mxu0 0.0
        %1063 = vmatprep.mubr.f32.mxu0 0.0
        %1064 = vmatmul.mubr.f32.gmra.mrb[0].mxu0 %v289
        %v1065 = vpop.f32.mrb[0].mxu0
        %v1066 = vadd.f32 0.0, %v1065
        %v1067 = vpop.f32.mrb[0].mxu0
        %1068 = vmatprep.mubr.f32.mxu0 0.0
        %1069 = vmatmul.mubr.f32.gmra.mrb[0].mxu0 %v292
        %v1070 = vpop.f32.mrb[0].mxu0
        %v1071 = vadd.f32 0.0, %v1070
        %v1072 = vpop.f32.mrb[0].mxu0
        %1073 = vmatprep.mubr.f32.mxu0 0.0
        %1074 = vmatmul.mubr.f32.gmra.mrb[0].mxu0 %v295
        %v1075 = vpop.f32.mrb[0].mxu0
        %v1076 = vadd.f32 0.0, %v1075
        %v1077 = vpop.f32.mrb[0].mxu0
        %1078 = vmatprep.mubr.f32.mxu0 0.0
        %1079 = vmatmul.mubr.f32.gmra.mrb[0].mxu0 %v298
        %v1080 = vpop.f32.mrb[0].mxu0
        %v1081 = vadd.f32 0.0, %v1080
        %v1082 = vpop.f32.mrb[0].mxu0
        %1083 = vdwg.mxu0
        %v1085 = vsel %vm287, %v1066, 0
        %v1088 = vsel %vm287, %v1071, 0
        %v1091 = vsel %vm287, %v1076, 0
        %v1094 = vsel %vm287, %v1081, 0
        %1096 = vmatprep.subr.mxu0 0.0
        %1097 = vmatpush1.msra.mxu0 %v234
        %1098 = vmatprep.subr.mxu0 0.0
        %1099 = vmatpush1.msra.mxu0 %v235
        %1100 = vmatprep.subr.mxu0 0.0
        %1101 = vmatpush1.msra.mxu0 0.0
        %1102 = vmatprep.subr.mxu0 0.0
        %1103 = vmatpush1.msra.mxu0 0.0
        %1104 = vmatprep.subr.mxu0 0.0
        %1105 = vmatpush1.msra.mxu0 0.0
        %1106 = vmatprep.subr.mxu0 0.0
        %1107 = vmatpush1.msra.mxu0 0.0
        %1108 = vmatprep.subr.mxu0 0.0
        %1109 = vmatpush1.msra.mxu0 0.0
        %1110 = vmatprep.subr.mxu0 0.0
        %1111 = vmatpush1.msra.mxu0 0.0
        %1112 = vmatprep.subr.mxu0 0.0
        %1113 = vmatpush1.msra.mxu0 0.0
        %1114 = vmatprep.subr.mxu0 0.0
        %1115 = vmatpush1.msra.mxu0 0.0
        %1116 = vmatprep.subr.mxu0 0.0
        %1117 = vmatpush1.msra.mxu0 0.0
        %1118 = vmatprep.subr.mxu0 0.0
        %1119 = vmatpush1.msra.mxu0 0.0
        %1120 = vmatprep.subr.mxu0 0.0
        %1121 = vmatpush1.msra.mxu0 0.0
        %1122 = vmatprep.subr.mxu0 0.0
        %1123 = vmatpush1.msra.mxu0 0.0
        %1124 = vmatprep.subr.mxu0 0.0
        %1125 = vmatpush1.msra.mxu0 0.0
        %1126 = vmatprep.subr.mxu0 0.0
        %1127 = vmatpush1.msra.mxu0 0.0
        %1128 = vmatprep.subr.mxu0 0.0
        %1129 = vmatpush1.msra.mxu0 0.0
        %1130 = vmatprep.subr.mxu0 0.0
        %1131 = vmatpush1.msra.mxu0 0.0
        %1132 = vmatprep.subr.mxu0 0.0
        %1133 = vmatpush1.msra.mxu0 0.0
        %1134 = vmatprep.subr.mxu0 0.0
        %1135 = vmatpush1.msra.mxu0 0.0
        %1136 = vmatprep.subr.mxu0 0.0
        %1137 = vmatpush1.msra.mxu0 0.0
        %1138 = vmatprep.subr.mxu0 0.0
        %1139 = vmatpush1.msra.mxu0 0.0
        %1140 = vmatprep.subr.mxu0 0.0
        %1141 = vmatpush1.msra.mxu0 0.0
        %1142 = vmatprep.subr.mxu0 0.0
        %1143 = vmatpush1.msra.mxu0 0.0
        %1144 = vmatprep.subr.mxu0 0.0
        %1145 = vmatpush1.msra.mxu0 0.0
        %1146 = vmatprep.subr.mxu0 0.0
        %1147 = vmatpush1.msra.mxu0 0.0
        %1148 = vmatprep.subr.mxu0 0.0
        %1149 = vmatpush1.msra.mxu0 0.0
        %1150 = vmatprep.subr.mxu0 0.0
        %1151 = vmatpush1.msra.mxu0 0.0
        %1152 = vmatprep.subr.mxu0 0.0
        %1153 = vmatpush1.msra.mxu0 0.0
        %1154 = vmatprep.subr.mxu0 0.0
        %1155 = vmatpush1.msra.mxu0 0.0
        %1156 = vmatprep.subr.mxu0 0.0
        %1157 = vmatpush1.msra.mxu0 0.0
        %1158 = vmatprep.subr.mxu0 0.0
        %1159 = vmatpush1.msra.mxu0 0.0
        %1160 = vmatprep.mubr.f32.mxu0 0.0
        %1161 = vmatmul.mubr.f32.gmra.mrb[0].mxu0 %v1085
        %v1162 = vpop.f32.mrb[0].mxu0
        %v1163 = vadd.f32 0.0, %v1162
        %v1164 = vpop.f32.mrb[0].mxu0
        %1165 = vmatprep.mubr.f32.mxu0 0.0
        %1166 = vmatmul.mubr.f32.gmra.mrb[0].mxu0 %v1088
        %v1167 = vpop.f32.mrb[0].mxu0
        %v1168 = vadd.f32 0.0, %v1167
        %v1169 = vpop.f32.mrb[0].mxu0
        %1170 = vmatprep.mubr.f32.mxu0 0.0
        %1171 = vmatmul.mubr.f32.gmra.mrb[0].mxu0 %v1091
        %v1172 = vpop.f32.mrb[0].mxu0
        %v1173 = vadd.f32 0.0, %v1172
        %v1174 = vpop.f32.mrb[0].mxu0
        %1175 = vmatprep.mubr.f32.mxu0 0.0
        %1176 = vmatmul.mubr.f32.gmra.mrb[0].mxu0 %v1094
        %v1177 = vpop.f32.mrb[0].mxu0
        %v1178 = vadd.f32 0.0, %v1177
        %v1179 = vpop.f32.mrb[0].mxu0
        %1180 = vdwg.mxu0
        %s1181 = scalar_lea.vmem %s229, 96 [#allocation7]
        %1182 = vst.msk [vmem:[%s1181] sm:$0xff] %vm482, %v1163
        %1183 = vst.msk [vmem:[%s1181 + $0x8] sm:$0xff] %vm482, %v1168
        %1184 = vst.msk [vmem:[%s1181 + $0x10] sm:$0xff] %vm482, %v1173
        %1185 = vst.msk [vmem:[%s1181 + $0x18] sm:$0xff] %vm482, %v1178
        %s1186 = sand.u32 %s119, 1
        %s1187 = scalar_lea.sflag [#allocation4], %s1186
        %s1188 = sand.u32 %s119, 1
        %s1189 = smul.addr %s1188, 128
        %s1190 = scalar_lea.vmem [#allocation7], %s1189
        // Predicated region
        $region45: #{tpu_custom_call.1} parent=35 // pred_check
          %p1191 = pneg %p129
        $region46: #{tpu_custom_call.1} parent=35 // pred_check_branch
          %1193 = sbr.rel (%p1191) target = $region48
        $region47: #{tpu_custom_call.1} parent=35 // pred_region
          %s1195 = ssub.s32 2048, 2048
          %1196 = vsyncadd %s1187, %s1195
          %s1197 = smul.addr %s22, 16
          %s1198 = smul.addr %s1197, 128
          %s1199 = scalar_lea.hbm %s4, %s1198
          %s1200 = sshll.u32 %s1190, 4
          %s1201 = int_to_ptr.vmem [resolvable:$true] %s1200
          %1206 = dma.vmem_to_hbm [thread:$0]  %s1201, 2048, %s1199, %s1187, 128, 128, 8
        $region48: #{tpu_custom_call.1} parent=35 // pred_fallthru
          _
      $region36: #{tpu_custom_call.1} parent=5 // pred_fallthru
        _
      %p1207 = scmp.le.s32.totalorder 2, %s17
      // Predicated region
      $region49: #{tpu_custom_call.1} parent=5 // pred_check
        %p1208 = pneg %p1207
      $region50: #{tpu_custom_call.1} parent=5 // pred_check_branch
        %1210 = sbr.rel (%p1208) target = $region52
      $region51: #{tpu_custom_call.1} parent=5 // pred_region
        %s1211 = ssub.s32 %s17, 2
        // Predicated region
        $region53: #{tpu_custom_call.1} parent=51 // pred_check
          %p1212 = pneg %p135
        $region54: #{tpu_custom_call.1} parent=51 // pred_check_branch
          %1214 = sbr.rel (%p1212) target = $region56
        $region55: #{tpu_custom_call.1} parent=51 // pred_region
          %s1215 = sand.u32 %s120, 1
          %s1216 = scalar_lea.sflag [#allocation4], %s1215
          %s1217 = sand.u32 %s120, 1
          %s1218 = smul.addr %s1217, 128
          %s1219 = scalar_lea.vmem [#allocation7], %s1218
          %1220 = dma.done %s1216, 2048
        $region56: #{tpu_custom_call.1} parent=51 // pred_fallthru
          _
      $region52: #{tpu_custom_call.1} parent=5 // pred_fallthru
        _
    $region6: #{tpu_custom_call.1} parent=1 // loop_footer
      %s21 = sadd.s32 1, %s17
    $region7: #{tpu_custom_call.1} parent=1 // loop_footer_branch
      %16 = sbr.rel target = $region3
    $region8: #{tpu_custom_call.1} parent=1 // loop_exit
      _
    %1221 = vsyncpa [#allocation3], 1
    %s1222 = scalar_lea.sflag [#allocation3], 1
    %1223 = vsyncpa %s1222, 1
    %1224 = vsyncpa [#allocation4], 1
    %s1225 = scalar_lea.sflag [#allocation4], 1
    %1226 = vsyncpa %s1225, 1
    %1227 = vsyncpa [#allocation5], 1
    %s1228 = scalar_lea.sflag [#allocation5], 1
    %1229 = vsyncpa %s1228, 1

</llo_original>
